<compile_context>
chip_gen: v7x
topology: tpu7x:2x2x1
jax: 0.10.0
libtpu: 0.0.40
codegen_flags: <defaults>
</compile_context>

<pallas_src>
import jax
import jax.numpy as jnp
from jax.experimental import pallas as pl
from jax.experimental.pallas import tpu as pltpu

# ---------------- model sizes (small, consistent with the module) ----------------
SOURCE_SIZE = 20   # vocab
EMBED = 32         # embed_size (free global in the PyTorch code)
HIDDEN = 32        # hidden_size
BATCH = 2
SEQLEN = 8


# ------------------------------ fused encoder kernel -----------------------------
def encoder_kernel(x_ref, wif_ref, whf_ref, bf_ref,
                   wib_ref, whb_ref, bb_ref,
                   wht_ref, bh_ref,
                   out_ref, feat_ref, hx_ref, cx_ref,
                   seqf_scr, seqb_scr):
    B, H = hx_ref.shape
    TB = x_ref.shape[0]
    T = TB // B

    x = x_ref[...]                                       # (T*B, E) fully resident
    # Hoist the input projections off the recurrent critical path: one MXU call
    # per direction, bias folded in.  Per timestep only h @ W_hh remains.
    xp_f = jnp.dot(x, wif_ref[...], preferred_element_type=jnp.float32) + bf_ref[...]
    xp_b = jnp.dot(x, wib_ref[...], preferred_element_type=jnp.float32) + bb_ref[...]
    whf = whf_ref[...]
    whb = whb_ref[...]

    def gates(z):
        # packed gate order is [i, f, o, g]:
        # one sigmoid over (B, 3H) + one tanh over (B, H)  -> 2 EUP pushes.
        sfo = jax.nn.sigmoid(z[:, :3 * H])
        g = jnp.tanh(z[:, 3 * H:])
        return sfo[:, :H], sfo[:, H:2 * H], sfo[:, 2 * H:], g

    zeros = jnp.zeros((B, H), jnp.float32)
    h_f, c_f = zeros, zeros
    h_b, c_b = zeros, zeros

    # Fully unrolled time loop; forward and backward interleaved in one body so
    # one direction's MXU/EUP latency hides behind the other's.
    for t in range(T):
        tb = T - 1 - t
        z_f = xp_f[t * B:(t + 1) * B, :] + jnp.dot(
            h_f, whf, preferred_element_type=jnp.float32)
        z_b = xp_b[tb * B:(tb + 1) * B, :] + jnp.dot(
            h_b, whb, preferred_element_type=jnp.float32)

        i_f, f_f, o_f, g_f = gates(z_f)
        i_b, f_b, o_b, g_b = gates(z_b)

        c_f = f_f * c_f + i_f * g_f
        h_f = o_f * jnp.tanh(c_f)
        c_b = f_b * c_b + i_b * g_b
        h_b = o_b * jnp.tanh(c_b)

        seqf_scr[pl.ds(t * B, B), :] = h_f
        seqb_scr[pl.ds(tb * B, B), :] = h_b

    # Epilogue: bidirectional sum + W_h projection + final-state sums, written once.
    seq = seqf_scr[...] + seqb_scr[...]                  # (T*B, H)
    out_ref[...] = seq
    feat_ref[...] = jnp.dot(seq, wht_ref[...],
                            preferred_element_type=jnp.float32) + bh_ref[...]
    hx_ref[...] = h_f + h_b
    cx_ref[...] = c_f + c_b


# ----------------------- parameter prep (wrapper-side glue) ----------------------
def _permute_gates(w):
    """Reorder PyTorch gate blocks [i, f, g, o] -> [i, f, o, g] along axis 0."""
    H = HIDDEN
    return jnp.concatenate([w[:2 * H], w[3 * H:4 * H], w[2 * H:3 * H]], axis=0)


def _prep_direction(w_ih, w_hh, b_ih, b_hh):
    w_ih_t = _permute_gates(w_ih).T                      # (E, 4H)
    w_hh_t = _permute_gates(w_hh).T                      # (H, 4H)
    b = _permute_gates(b_ih + b_hh)[None, :]             # (1, 4H)
    return w_ih_t, w_hh_t, b


# ------------------------------- encoder forward ---------------------------------
@jax.jit
def encoder_forward(tokens, params):
    B, T = tokens.shape
    H = HIDDEN

    # nn.Embedding(padding_idx=0): row 0 of the table is zero.  Gather is glue.
    embed = params["embedding"][tokens]                  # (B, T, E)
    # Dropout(p=0.2) in eval mode -> identity.
    x2d = jnp.transpose(embed, (1, 0, 2)).reshape(T * B, EMBED).astype(jnp.float32)

    wif, whf, bf = _prep_direction(params["w_ih_f"], params["w_hh_f"],
                                   params["b_ih_f"], params["b_hh_f"])
    wib, whb, bb = _prep_direction(params["w_ih_b"], params["w_hh_b"],
                                   params["b_ih_b"], params["b_hh_b"])
    wht = params["w_h"].T                                # (H, H)
    bh = params["b_h"][None, :]                          # (1, H)

    full2d = lambda shape: pl.BlockSpec(shape, lambda i: (0, 0))
    ins = (x2d, wif, whf, bf, wib, whb, bb, wht, bh)

    enc_flat, feat_flat, hx, cx = pl.pallas_call(
        encoder_kernel,
        grid=(1,),
        in_specs=[full2d(a.shape) for a in ins],
        out_specs=[full2d((T * B, H)), full2d((T * B, H)),
                   full2d((B, H)), full2d((B, H))],
        out_shape=[
            jax.ShapeDtypeStruct((T * B, H), jnp.float32),
            jax.ShapeDtypeStruct((T * B, H), jnp.float32),
            jax.ShapeDtypeStruct((B, H), jnp.float32),
            jax.ShapeDtypeStruct((B, H), jnp.float32),
        ],
        scratch_shapes=[pltpu.VMEM((T * B, H), jnp.float32),
                        pltpu.VMEM((T * B, H), jnp.float32)],
        compiler_params=pltpu.CompilerParams(dimension_semantics=("arbitrary",)),
    )(*ins)

    encoder_outputs = enc_flat.reshape(T, B, H)          # pad_packed_sequence layout
    encoder_feature = feat_flat.reshape(T, B, H)         # W_h(encoder_outputs)
    return encoder_outputs, encoder_feature, hx, cx      # hx/cx: (B, H)


# ------------------------------ pure-JAX reference -------------------------------
def lstm_ref(x_tbe, w_ih, w_hh, b_ih, b_hh, reverse):
    T, B, E = x_tbe.shape
    H = w_hh.shape[1]
    xs = x_tbe[::-1] if reverse else x_tbe

    def step(carry, x_t):
        h, c = carry
        z = x_t @ w_ih.T + h @ w_hh.T + b_ih + b_hh      # PyTorch gate order [i,f,g,o]
        i = jax.nn.sigmoid(z[:, :H])
        f = jax.nn.sigmoid(z[:, H:2 * H])
        g = jnp.tanh(z[:, 2 * H:3 * H])
        o = jax.nn.sigmoid(z[:, 3 * H:])
        c = f * c + i * g
        h = o * jnp.tanh(c)
        return (h, c), h

    (h, c), seq = jax.lax.scan(step, (jnp.zeros((B, H)), jnp.zeros((B, H))), xs)
    if reverse:
        seq = seq[::-1]
    return seq, h, c


def encoder_ref(tokens, params):
    x = jnp.transpose(params["embedding"][tokens], (1, 0, 2)).astype(jnp.float32)
    sf, hf, cf = lstm_ref(x, params["w_ih_f"], params["w_hh_f"],
                          params["b_ih_f"], params["b_hh_f"], False)
    sb, hb, cb = lstm_ref(x, params["w_ih_b"], params["w_hh_b"],
                          params["b_ih_b"], params["b_hh_b"], True)
    enc = sf + sb
    feat = enc @ params["w_h"].T + params["b_h"]
    return enc, feat, hf + hb, cf + cb


# ------------------------------------ params -------------------------------------
def init_params(key):
    ks = jax.random.split(key, 12)
    sc = 0.1
    emb = jax.random.normal(ks[0], (SOURCE_SIZE, EMBED), jnp.float32) * sc
    emb = emb.at[0].set(0.0)                             # padding_idx=0

    def lstm_dir(k0, k1, k2, k3):
        return (jax.random.normal(k0, (4 * HIDDEN, EMBED), jnp.float32) * sc,
                jax.random.normal(k1, (4 * HIDDEN, HIDDEN), jnp.float32) * sc,
                jax.random.normal(k2, (4 * HIDDEN,), jnp.float32) * sc,
                jax.random.normal(k3, (4 * HIDDEN,), jnp.float32) * sc)

    w_ih_f, w_hh_f, b_ih_f, b_hh_f = lstm_dir(ks[1], ks[2], ks[3], ks[4])
    w_ih_b, w_hh_b, b_ih_b, b_hh_b = lstm_dir(ks[5], ks[6], ks[7], ks[8])
    w_h = jax.random.normal(ks[9], (HIDDEN, HIDDEN), jnp.float32) * sc   # nn.Linear
    b_h = jax.random.normal(ks[10], (HIDDEN,), jnp.float32) * sc

    return dict(embedding=emb,
                w_ih_f=w_ih_f, w_hh_f=w_hh_f, b_ih_f=b_ih_f, b_hh_f=b_hh_f,
                w_ih_b=w_ih_b, w_hh_b=w_hh_b, b_ih_b=b_ih_b, b_hh_b=b_hh_b,
                w_h=w_h, b_h=b_h)


if __name__ == "__main__":
    key = jax.random.PRNGKey(0)
    pkey, tkey = jax.random.split(key)
    params = init_params(pkey)
    # tokens in [1, SOURCE_SIZE); padding row exists in the table by construction.
    tokens = jax.random.randint(tkey, (BATCH, SEQLEN), 1, SOURCE_SIZE, dtype=jnp.int32)

    outs = jax.block_until_ready(encoder_forward(tokens, params))
    enc_out, enc_feat, hx, cx = outs

    ref = encoder_ref(tokens, params)
    for got, want in zip((enc_out, enc_feat, hx, cx), ref):
        assert got.shape == want.shape, (got.shape, want.shape)
        assert jnp.allclose(got, want, atol=1e-4, rtol=1e-4), "mismatch vs reference"

    assert enc_out.shape == (SEQLEN, BATCH, HIDDEN)
    assert enc_feat.shape == (SEQLEN, BATCH, HIDDEN)
    assert hx.shape == (BATCH, HIDDEN) and cx.shape == (BATCH, HIDDEN)
    print("KERNEL_OK")
</pallas_src>

<mosaic_0001>
module attributes {stable_mosaic.version = 11 : i64} {
  func.func @encoder_kernel(%arg0: i32, %arg1: memref<16x32xf32, #tpu.memory_space<vmem>>, %arg2: memref<32x128xf32, #tpu.memory_space<vmem>>, %arg3: memref<32x128xf32, #tpu.memory_space<vmem>>, %arg4: memref<1x128xf32, #tpu.memory_space<vmem>>, %arg5: memref<32x128xf32, #tpu.memory_space<vmem>>, %arg6: memref<32x128xf32, #tpu.memory_space<vmem>>, %arg7: memref<1x128xf32, #tpu.memory_space<vmem>>, %arg8: memref<32x32xf32, #tpu.memory_space<vmem>>, %arg9: memref<1x32xf32, #tpu.memory_space<vmem>>, %arg10: memref<16x32xf32, #tpu.memory_space<vmem>>, %arg11: memref<16x32xf32, #tpu.memory_space<vmem>>, %arg12: memref<2x32xf32, #tpu.memory_space<vmem>>, %arg13: memref<2x32xf32, #tpu.memory_space<vmem>>, %arg14: memref<16x32xf32, #tpu.memory_space<vmem>>, %arg15: memref<16x32xf32, #tpu.memory_space<vmem>>) attributes {dimension_semantics = [#tpu.dimension_semantics<arbitrary>], iteration_bounds = array<i64: 1>, scalar_prefetch = 0 : i64, scratch_operands = 2 : i64, tpu.core_type = #tpu.core_type<tc>, window_params = [{pipeline_mode = #tpu.pipeline_mode<synchronous>, transform_indices = @transform_0, window_bounds = array<i64: 16, 32>}, {pipeline_mode = #tpu.pipeline_mode<synchronous>, transform_indices = @transform_1, window_bounds = array<i64: 32, 128>}, {pipeline_mode = #tpu.pipeline_mode<synchronous>, transform_indices = @transform_2, window_bounds = array<i64: 32, 128>}, {pipeline_mode = #tpu.pipeline_mode<synchronous>, transform_indices = @transform_3, window_bounds = array<i64: 1, 128>}, {pipeline_mode = #tpu.pipeline_mode<synchronous>, transform_indices = @transform_4, window_bounds = array<i64: 32, 128>}, {pipeline_mode = #tpu.pipeline_mode<synchronous>, transform_indices = @transform_5, window_bounds = array<i64: 32, 128>}, {pipeline_mode = #tpu.pipeline_mode<synchronous>, transform_indices = @transform_6, window_bounds = array<i64: 1, 128>}, {pipeline_mode = #tpu.pipeline_mode<synchronous>, transform_indices = @transform_7, window_bounds = array<i64: 32, 32>}, {pipeline_mode = #tpu.pipeline_mode<synchronous>, transform_indices = @transform_8, window_bounds = array<i64: 1, 32>}, {pipeline_mode = #tpu.pipeline_mode<synchronous>, transform_indices = @transform_9, window_bounds = array<i64: 16, 32>}, {pipeline_mode = #tpu.pipeline_mode<synchronous>, transform_indices = @transform_10, window_bounds = array<i64: 16, 32>}, {pipeline_mode = #tpu.pipeline_mode<synchronous>, transform_indices = @transform_11, window_bounds = array<i64: 2, 32>}, {pipeline_mode = #tpu.pipeline_mode<synchronous>, transform_indices = @transform_12, window_bounds = array<i64: 2, 32>}]} {
    %c0 = arith.constant 0 : index
    %c0_0 = arith.constant 0 : index
    %0 = vector.load %arg1[%c0, %c0_0] : memref<16x32xf32, #tpu.memory_space<vmem>>, vector<16x32xf32>
    %c0_1 = arith.constant 0 : index
    %c0_2 = arith.constant 0 : index
    %1 = vector.load %arg2[%c0_1, %c0_2] : memref<32x128xf32, #tpu.memory_space<vmem>>, vector<32x128xf32>
    %cst = arith.constant dense<0.000000e+00> : vector<16x128xf32>
    %2 = tpu.matmul %0, %1, %cst {dimension_numbers = #tpu.dot_dimension_numbers<[1], [0], [0], [1], [0, 0, 1, 1], [], []>} : vector<16x32xf32>, vector<32x128xf32>, vector<16x128xf32> -> vector<16x128xf32>
    %c0_3 = arith.constant 0 : index
    %c0_4 = arith.constant 0 : index
    %3 = vector.load %arg4[%c0_3, %c0_4] : memref<1x128xf32, #tpu.memory_space<vmem>>, vector<1x128xf32>
    %4 = vector.broadcast %3 : vector<1x128xf32> to vector<16x128xf32>
    %5 = arith.addf %2, %4 : vector<16x128xf32>
    %c0_5 = arith.constant 0 : index
    %c0_6 = arith.constant 0 : index
    %6 = vector.load %arg5[%c0_5, %c0_6] : memref<32x128xf32, #tpu.memory_space<vmem>>, vector<32x128xf32>
    %cst_7 = arith.constant dense<0.000000e+00> : vector<16x128xf32>
    %7 = tpu.matmul %0, %6, %cst_7 {dimension_numbers = #tpu.dot_dimension_numbers<[1], [0], [0], [1], [0, 0, 1, 1], [], []>} : vector<16x32xf32>, vector<32x128xf32>, vector<16x128xf32> -> vector<16x128xf32>
    %c0_8 = arith.constant 0 : index
    %c0_9 = arith.constant 0 : index
    %8 = vector.load %arg7[%c0_8, %c0_9] : memref<1x128xf32, #tpu.memory_space<vmem>>, vector<1x128xf32>
    %9 = vector.broadcast %8 : vector<1x128xf32> to vector<16x128xf32>
    %10 = arith.addf %7, %9 : vector<16x128xf32>
    %c0_10 = arith.constant 0 : index
    %c0_11 = arith.constant 0 : index
    %11 = vector.load %arg3[%c0_10, %c0_11] : memref<32x128xf32, #tpu.memory_space<vmem>>, vector<32x128xf32>
    %c0_12 = arith.constant 0 : index
    %c0_13 = arith.constant 0 : index
    %12 = vector.load %arg6[%c0_12, %c0_13] : memref<32x128xf32, #tpu.memory_space<vmem>>, vector<32x128xf32>
    %cst_14 = arith.constant 0.000000e+00 : f32
    %13 = vector.broadcast %cst_14 : f32 to vector<2x32xf32>
    %14 = vector.extract_strided_slice %5 {offsets = [0, 0], sizes = [2, 128], strides = [1, 1]} : vector<16x128xf32> to vector<2x128xf32>
    %cst_15 = arith.constant dense<0.000000e+00> : vector<2x128xf32>
    %15 = tpu.matmul %13, %11, %cst_15 {dimension_numbers = #tpu.dot_dimension_numbers<[1], [0], [0], [1], [0, 0, 1, 1], [], []>} : vector<2x32xf32>, vector<32x128xf32>, vector<2x128xf32> -> vector<2x128xf32>
    %16 = arith.addf %14, %15 : vector<2x128xf32>
    %17 = vector.extract_strided_slice %10 {offsets = [14, 0], sizes = [2, 128], strides = [1, 1]} : vector<16x128xf32> to vector<2x128xf32>
    %cst_16 = arith.constant dense<0.000000e+00> : vector<2x128xf32>
    %18 = tpu.matmul %13, %12, %cst_16 {dimension_numbers = #tpu.dot_dimension_numbers<[1], [0], [0], [1], [0, 0, 1, 1], [], []>} : vector<2x32xf32>, vector<32x128xf32>, vector<2x128xf32> -> vector<2x128xf32>
    %19 = arith.addf %17, %18 : vector<2x128xf32>
    %20 = vector.extract_strided_slice %16 {offsets = [0, 0], sizes = [2, 96], strides = [1, 1]} : vector<2x128xf32> to vector<2x96xf32>
    %21 = arith.negf %20 : vector<2x96xf32>
    %22 = math.exp %21 : vector<2x96xf32>
    %cst_17 = arith.constant 1.000000e+00 : f32
    %23 = vector.broadcast %cst_17 : f32 to vector<2x96xf32>
    %24 = arith.addf %23, %22 : vector<2x96xf32>
    %25 = arith.divf %23, %24 : vector<2x96xf32>
    %26 = vector.extract_strided_slice %16 {offsets = [0, 96], sizes = [2, 32], strides = [1, 1]} : vector<2x128xf32> to vector<2x32xf32>
    %27 = math.tanh %26 : vector<2x32xf32>
    %28 = vector.extract_strided_slice %25 {offsets = [0, 0], sizes = [2, 32], strides = [1, 1]} : vector<2x96xf32> to vector<2x32xf32>
    %29 = vector.extract_strided_slice %25 {offsets = [0, 32], sizes = [2, 32], strides = [1, 1]} : vector<2x96xf32> to vector<2x32xf32>
    %30 = vector.extract_strided_slice %25 {offsets = [0, 64], sizes = [2, 32], strides = [1, 1]} : vector<2x96xf32> to vector<2x32xf32>
    %31 = vector.extract_strided_slice %19 {offsets = [0, 0], sizes = [2, 96], strides = [1, 1]} : vector<2x128xf32> to vector<2x96xf32>
    %32 = arith.negf %31 : vector<2x96xf32>
    %33 = math.exp %32 : vector<2x96xf32>
    %cst_18 = arith.constant 1.000000e+00 : f32
    %34 = vector.broadcast %cst_18 : f32 to vector<2x96xf32>
    %35 = arith.addf %34, %33 : vector<2x96xf32>
    %36 = arith.divf %34, %35 : vector<2x96xf32>
    %37 = vector.extract_strided_slice %19 {offsets = [0, 96], sizes = [2, 32], strides = [1, 1]} : vector<2x128xf32> to vector<2x32xf32>
    %38 = math.tanh %37 : vector<2x32xf32>
    %39 = vector.extract_strided_slice %36 {offsets = [0, 0], sizes = [2, 32], strides = [1, 1]} : vector<2x96xf32> to vector<2x32xf32>
    %40 = vector.extract_strided_slice %36 {offsets = [0, 32], sizes = [2, 32], strides = [1, 1]} : vector<2x96xf32> to vector<2x32xf32>
    %41 = vector.extract_strided_slice %36 {offsets = [0, 64], sizes = [2, 32], strides = [1, 1]} : vector<2x96xf32> to vector<2x32xf32>
    %42 = arith.mulf %29, %13 : vector<2x32xf32>
    %43 = arith.mulf %28, %27 : vector<2x32xf32>
    %44 = arith.addf %42, %43 : vector<2x32xf32>
    %45 = math.tanh %44 : vector<2x32xf32>
    %46 = arith.mulf %30, %45 : vector<2x32xf32>
    %47 = arith.mulf %40, %13 : vector<2x32xf32>
    %48 = arith.mulf %39, %38 : vector<2x32xf32>
    %49 = arith.addf %47, %48 : vector<2x32xf32>
    %50 = math.tanh %49 : vector<2x32xf32>
    %51 = arith.mulf %41, %50 : vector<2x32xf32>
    %c0_19 = arith.constant 0 : index
    %c0_20 = arith.constant 0 : index
    %52 = vector.load %arg14[%c0_19, %c0_20] : memref<16x32xf32, #tpu.memory_space<vmem>>, vector<2x32xf32>
    tpu.vector_store %arg14[%c0_19, %c0_20], %46 {strides = array<i32>} : memref<16x32xf32, #tpu.memory_space<vmem>>, vector<2x32xf32>,
    %c14 = arith.constant 14 : index
    %c0_21 = arith.constant 0 : index
    %53 = vector.load %arg15[%c14, %c0_21] : memref<16x32xf32, #tpu.memory_space<vmem>>, vector<2x32xf32>
    tpu.vector_store %arg15[%c14, %c0_21], %51 {strides = array<i32>} : memref<16x32xf32, #tpu.memory_space<vmem>>, vector<2x32xf32>,
    %54 = vector.extract_strided_slice %5 {offsets = [2, 0], sizes = [2, 128], strides = [1, 1]} : vector<16x128xf32> to vector<2x128xf32>
    %cst_22 = arith.constant dense<0.000000e+00> : vector<2x128xf32>
    %55 = tpu.matmul %46, %11, %cst_22 {dimension_numbers = #tpu.dot_dimension_numbers<[1], [0], [0], [1], [0, 0, 1, 1], [], []>} : vector<2x32xf32>, vector<32x128xf32>, vector<2x128xf32> -> vector<2x128xf32>
    %56 = arith.addf %54, %55 : vector<2x128xf32>
    %57 = vector.extract_strided_slice %10 {offsets = [12, 0], sizes = [2, 128], strides = [1, 1]} : vector<16x128xf32> to vector<2x128xf32>
    %cst_23 = arith.constant dense<0.000000e+00> : vector<2x128xf32>
    %58 = tpu.matmul %51, %12, %cst_23 {dimension_numbers = #tpu.dot_dimension_numbers<[1], [0], [0], [1], [0, 0, 1, 1], [], []>} : vector<2x32xf32>, vector<32x128xf32>, vector<2x128xf32> -> vector<2x128xf32>
    %59 = arith.addf %57, %58 : vector<2x128xf32>
    %60 = vector.extract_strided_slice %56 {offsets = [0, 0], sizes = [2, 96], strides = [1, 1]} : vector<2x128xf32> to vector<2x96xf32>
    %61 = arith.negf %60 : vector<2x96xf32>
    %62 = math.exp %61 : vector<2x96xf32>
    %cst_24 = arith.constant 1.000000e+00 : f32
    %63 = vector.broadcast %cst_24 : f32 to vector<2x96xf32>
    %64 = arith.addf %63, %62 : vector<2x96xf32>
    %65 = arith.divf %63, %64 : vector<2x96xf32>
    %66 = vector.extract_strided_slice %56 {offsets = [0, 96], sizes = [2, 32], strides = [1, 1]} : vector<2x128xf32> to vector<2x32xf32>
    %67 = math.tanh %66 : vector<2x32xf32>
    %68 = vector.extract_strided_slice %65 {offsets = [0, 0], sizes = [2, 32], strides = [1, 1]} : vector<2x96xf32> to vector<2x32xf32>
    %69 = vector.extract_strided_slice %65 {offsets = [0, 32], sizes = [2, 32], strides = [1, 1]} : vector<2x96xf32> to vector<2x32xf32>
    %70 = vector.extract_strided_slice %65 {offsets = [0, 64], sizes = [2, 32], strides = [1, 1]} : vector<2x96xf32> to vector<2x32xf32>
    %71 = vector.extract_strided_slice %59 {offsets = [0, 0], sizes = [2, 96], strides = [1, 1]} : vector<2x128xf32> to vector<2x96xf32>
    %72 = arith.negf %71 : vector<2x96xf32>
    %73 = math.exp %72 : vector<2x96xf32>
    %cst_25 = arith.constant 1.000000e+00 : f32
    %74 = vector.broadcast %cst_25 : f32 to vector<2x96xf32>
    %75 = arith.addf %74, %73 : vector<2x96xf32>
    %76 = arith.divf %74, %75 : vector<2x96xf32>
    %77 = vector.extract_strided_slice %59 {offsets = [0, 96], sizes = [2, 32], strides = [1, 1]} : vector<2x128xf32> to vector<2x32xf32>
    %78 = math.tanh %77 : vector<2x32xf32>
    %79 = vector.extract_strided_slice %76 {offsets = [0, 0], sizes = [2, 32], strides = [1, 1]} : vector<2x96xf32> to vector<2x32xf32>
    %80 = vector.extract_strided_slice %76 {offsets = [0, 32], sizes = [2, 32], strides = [1, 1]} : vector<2x96xf32> to vector<2x32xf32>
    %81 = vector.extract_strided_slice %76 {offsets = [0, 64], sizes = [2, 32], strides = [1, 1]} : vector<2x96xf32> to vector<2x32xf32>
    %82 = arith.mulf %69, %44 : vector<2x32xf32>
    %83 = arith.mulf %68, %67 : vector<2x32xf32>
    %84 = arith.addf %82, %83 : vector<2x32xf32>
    %85 = math.tanh %84 : vector<2x32xf32>
    %86 = arith.mulf %70, %85 : vector<2x32xf32>
    %87 = arith.mulf %80, %49 : vector<2x32xf32>
    %88 = arith.mulf %79, %78 : vector<2x32xf32>
    %89 = arith.addf %87, %88 : vector<2x32xf32>
    %90 = math.tanh %89 : vector<2x32xf32>
    %91 = arith.mulf %81, %90 : vector<2x32xf32>
    %c2 = arith.constant 2 : index
    %c0_26 = arith.constant 0 : index
    %92 = vector.load %arg14[%c2, %c0_26] : memref<16x32xf32, #tpu.memory_space<vmem>>, vector<2x32xf32>
    tpu.vector_store %arg14[%c2, %c0_26], %86 {strides = array<i32>} : memref<16x32xf32, #tpu.memory_space<vmem>>, vector<2x32xf32>,
    %c12 = arith.constant 12 : index
    %c0_27 = arith.constant 0 : index
    %93 = vector.load %arg15[%c12, %c0_27] : memref<16x32xf32, #tpu.memory_space<vmem>>, vector<2x32xf32>
    tpu.vector_store %arg15[%c12, %c0_27], %91 {strides = array<i32>} : memref<16x32xf32, #tpu.memory_space<vmem>>, vector<2x32xf32>,
    %94 = vector.extract_strided_slice %5 {offsets = [4, 0], sizes = [2, 128], strides = [1, 1]} : vector<16x128xf32> to vector<2x128xf32>
    %cst_28 = arith.constant dense<0.000000e+00> : vector<2x128xf32>
    %95 = tpu.matmul %86, %11, %cst_28 {dimension_numbers = #tpu.dot_dimension_numbers<[1], [0], [0], [1], [0, 0, 1, 1], [], []>} : vector<2x32xf32>, vector<32x128xf32>, vector<2x128xf32> -> vector<2x128xf32>
    %96 = arith.addf %94, %95 : vector<2x128xf32>
    %97 = vector.extract_strided_slice %10 {offsets = [10, 0], sizes = [2, 128], strides = [1, 1]} : vector<16x128xf32> to vector<2x128xf32>
    %cst_29 = arith.constant dense<0.000000e+00> : vector<2x128xf32>
    %98 = tpu.matmul %91, %12, %cst_29 {dimension_numbers = #tpu.dot_dimension_numbers<[1], [0], [0], [1], [0, 0, 1, 1], [], []>} : vector<2x32xf32>, vector<32x128xf32>, vector<2x128xf32> -> vector<2x128xf32>
    %99 = arith.addf %97, %98 : vector<2x128xf32>
    %100 = vector.extract_strided_slice %96 {offsets = [0, 0], sizes = [2, 96], strides = [1, 1]} : vector<2x128xf32> to vector<2x96xf32>
    %101 = arith.negf %100 : vector<2x96xf32>
    %102 = math.exp %101 : vector<2x96xf32>
    %cst_30 = arith.constant 1.000000e+00 : f32
    %103 = vector.broadcast %cst_30 : f32 to vector<2x96xf32>
    %104 = arith.addf %103, %102 : vector<2x96xf32>
    %105 = arith.divf %103, %104 : vector<2x96xf32>
    %106 = vector.extract_strided_slice %96 {offsets = [0, 96], sizes = [2, 32], strides = [1, 1]} : vector<2x128xf32> to vector<2x32xf32>
    %107 = math.tanh %106 : vector<2x32xf32>
    %108 = vector.extract_strided_slice %105 {offsets = [0, 0], sizes = [2, 32], strides = [1, 1]} : vector<2x96xf32> to vector<2x32xf32>
    %109 = vector.extract_strided_slice %105 {offsets = [0, 32], sizes = [2, 32], strides = [1, 1]} : vector<2x96xf32> to vector<2x32xf32>
    %110 = vector.extract_strided_slice %105 {offsets = [0, 64], sizes = [2, 32], strides = [1, 1]} : vector<2x96xf32> to vector<2x32xf32>
    %111 = vector.extract_strided_slice %99 {offsets = [0, 0], sizes = [2, 96], strides = [1, 1]} : vector<2x128xf32> to vector<2x96xf32>
    %112 = arith.negf %111 : vector<2x96xf32>
    %113 = math.exp %112 : vector<2x96xf32>
    %cst_31 = arith.constant 1.000000e+00 : f32
    %114 = vector.broadcast %cst_31 : f32 to vector<2x96xf32>
    %115 = arith.addf %114, %113 : vector<2x96xf32>
    %116 = arith.divf %114, %115 : vector<2x96xf32>
    %117 = vector.extract_strided_slice %99 {offsets = [0, 96], sizes = [2, 32], strides = [1, 1]} : vector<2x128xf32> to vector<2x32xf32>
    %118 = math.tanh %117 : vector<2x32xf32>
    %119 = vector.extract_strided_slice %116 {offsets = [0, 0], sizes = [2, 32], strides = [1, 1]} : vector<2x96xf32> to vector<2x32xf32>
    %120 = vector.extract_strided_slice %116 {offsets = [0, 32], sizes = [2, 32], strides = [1, 1]} : vector<2x96xf32> to vector<2x32xf32>
    %121 = vector.extract_strided_slice %116 {offsets = [0, 64], sizes = [2, 32], strides = [1, 1]} : vector<2x96xf32> to vector<2x32xf32>
    %122 = arith.mulf %109, %84 : vector<2x32xf32>
    %123 = arith.mulf %108, %107 : vector<2x32xf32>
    %124 = arith.addf %122, %123 : vector<2x32xf32>
    %125 = math.tanh %124 : vector<2x32xf32>
    %126 = arith.mulf %110, %125 : vector<2x32xf32>
    %127 = arith.mulf %120, %89 : vector<2x32xf32>
    %128 = arith.mulf %119, %118 : vector<2x32xf32>
    %129 = arith.addf %127, %128 : vector<2x32xf32>
    %130 = math.tanh %129 : vector<2x32xf32>
    %131 = arith.mulf %121, %130 : vector<2x32xf32>
    %c4 = arith.constant 4 : index
    %c0_32 = arith.constant 0 : index
    %132 = vector.load %arg14[%c4, %c0_32] : memref<16x32xf32, #tpu.memory_space<vmem>>, vector<2x32xf32>
    tpu.vector_store %arg14[%c4, %c0_32], %126 {strides = array<i32>} : memref<16x32xf32, #tpu.memory_space<vmem>>, vector<2x32xf32>,
    %c10 = arith.constant 10 : index
    %c0_33 = arith.constant 0 : index
    %133 = vector.load %arg15[%c10, %c0_33] : memref<16x32xf32, #tpu.memory_space<vmem>>, vector<2x32xf32>
    tpu.vector_store %arg15[%c10, %c0_33], %131 {strides = array<i32>} : memref<16x32xf32, #tpu.memory_space<vmem>>, vector<2x32xf32>,
    %134 = vector.extract_strided_slice %5 {offsets = [6, 0], sizes = [2, 128], strides = [1, 1]} : vector<16x128xf32> to vector<2x128xf32>
    %cst_34 = arith.constant dense<0.000000e+00> : vector<2x128xf32>
    %135 = tpu.matmul %126, %11, %cst_34 {dimension_numbers = #tpu.dot_dimension_numbers<[1], [0], [0], [1], [0, 0, 1, 1], [], []>} : vector<2x32xf32>, vector<32x128xf32>, vector<2x128xf32> -> vector<2x128xf32>
    %136 = arith.addf %134, %135 : vector<2x128xf32>
    %137 = vector.extract_strided_slice %10 {offsets = [8, 0], sizes = [2, 128], strides = [1, 1]} : vector<16x128xf32> to vector<2x128xf32>
    %cst_35 = arith.constant dense<0.000000e+00> : vector<2x128xf32>
    %138 = tpu.matmul %131, %12, %cst_35 {dimension_numbers = #tpu.dot_dimension_numbers<[1], [0], [0], [1], [0, 0, 1, 1], [], []>} : vector<2x32xf32>, vector<32x128xf32>, vector<2x128xf32> -> vector<2x128xf32>
    %139 = arith.addf %137, %138 : vector<2x128xf32>
    %140 = vector.extract_strided_slice %136 {offsets = [0, 0], sizes = [2, 96], strides = [1, 1]} : vector<2x128xf32> to vector<2x96xf32>
    %141 = arith.negf %140 : vector<2x96xf32>
    %142 = math.exp %141 : vector<2x96xf32>
    %cst_36 = arith.constant 1.000000e+00 : f32
    %143 = vector.broadcast %cst_36 : f32 to vector<2x96xf32>
    %144 = arith.addf %143, %142 : vector<2x96xf32>
    %145 = arith.divf %143, %144 : vector<2x96xf32>
    %146 = vector.extract_strided_slice %136 {offsets = [0, 96], sizes = [2, 32], strides = [1, 1]} : vector<2x128xf32> to vector<2x32xf32>
    %147 = math.tanh %146 : vector<2x32xf32>
    %148 = vector.extract_strided_slice %145 {offsets = [0, 0], sizes = [2, 32], strides = [1, 1]} : vector<2x96xf32> to vector<2x32xf32>
    %149 = vector.extract_strided_slice %145 {offsets = [0, 32], sizes = [2, 32], strides = [1, 1]} : vector<2x96xf32> to vector<2x32xf32>
    %150 = vector.extract_strided_slice %145 {offsets = [0, 64], sizes = [2, 32], strides = [1, 1]} : vector<2x96xf32> to vector<2x32xf32>
    %151 = vector.extract_strided_slice %139 {offsets = [0, 0], sizes = [2, 96], strides = [1, 1]} : vector<2x128xf32> to vector<2x96xf32>
    %152 = arith.negf %151 : vector<2x96xf32>
    %153 = math.exp %152 : vector<2x96xf32>
    %cst_37 = arith.constant 1.000000e+00 : f32
    %154 = vector.broadcast %cst_37 : f32 to vector<2x96xf32>
    %155 = arith.addf %154, %153 : vector<2x96xf32>
    %156 = arith.divf %154, %155 : vector<2x96xf32>
    %157 = vector.extract_strided_slice %139 {offsets = [0, 96], sizes = [2, 32], strides = [1, 1]} : vector<2x128xf32> to vector<2x32xf32>
    %158 = math.tanh %157 : vector<2x32xf32>
    %159 = vector.extract_strided_slice %156 {offsets = [0, 0], sizes = [2, 32], strides = [1, 1]} : vector<2x96xf32> to vector<2x32xf32>
    %160 = vector.extract_strided_slice %156 {offsets = [0, 32], sizes = [2, 32], strides = [1, 1]} : vector<2x96xf32> to vector<2x32xf32>
    %161 = vector.extract_strided_slice %156 {offsets = [0, 64], sizes = [2, 32], strides = [1, 1]} : vector<2x96xf32> to vector<2x32xf32>
    %162 = arith.mulf %149, %124 : vector<2x32xf32>
    %163 = arith.mulf %148, %147 : vector<2x32xf32>
    %164 = arith.addf %162, %163 : vector<2x32xf32>
    %165 = math.tanh %164 : vector<2x32xf32>
    %166 = arith.mulf %150, %165 : vector<2x32xf32>
    %167 = arith.mulf %160, %129 : vector<2x32xf32>
    %168 = arith.mulf %159, %158 : vector<2x32xf32>
    %169 = arith.addf %167, %168 : vector<2x32xf32>
    %170 = math.tanh %169 : vector<2x32xf32>
    %171 = arith.mulf %161, %170 : vector<2x32xf32>
    %c6 = arith.constant 6 : index
    %c0_38 = arith.constant 0 : index
    %172 = vector.load %arg14[%c6, %c0_38] : memref<16x32xf32, #tpu.memory_space<vmem>>, vector<2x32xf32>
    tpu.vector_store %arg14[%c6, %c0_38], %166 {strides = array<i32>} : memref<16x32xf32, #tpu.memory_space<vmem>>, vector<2x32xf32>,
    %c8 = arith.constant 8 : index
    %c0_39 = arith.constant 0 : index
    %173 = vector.load %arg15[%c8, %c0_39] : memref<16x32xf32, #tpu.memory_space<vmem>>, vector<2x32xf32>
    tpu.vector_store %arg15[%c8, %c0_39], %171 {strides = array<i32>} : memref<16x32xf32, #tpu.memory_space<vmem>>, vector<2x32xf32>,
    %174 = vector.extract_strided_slice %5 {offsets = [8, 0], sizes = [2, 128], strides = [1, 1]} : vector<16x128xf32> to vector<2x128xf32>
    %cst_40 = arith.constant dense<0.000000e+00> : vector<2x128xf32>
    %175 = tpu.matmul %166, %11, %cst_40 {dimension_numbers = #tpu.dot_dimension_numbers<[1], [0], [0], [1], [0, 0, 1, 1], [], []>} : vector<2x32xf32>, vector<32x128xf32>, vector<2x128xf32> -> vector<2x128xf32>
    %176 = arith.addf %174, %175 : vector<2x128xf32>
    %177 = vector.extract_strided_slice %10 {offsets = [6, 0], sizes = [2, 128], strides = [1, 1]} : vector<16x128xf32> to vector<2x128xf32>
    %cst_41 = arith.constant dense<0.000000e+00> : vector<2x128xf32>
    %178 = tpu.matmul %171, %12, %cst_41 {dimension_numbers = #tpu.dot_dimension_numbers<[1], [0], [0], [1], [0, 0, 1, 1], [], []>} : vector<2x32xf32>, vector<32x128xf32>, vector<2x128xf32> -> vector<2x128xf32>
    %179 = arith.addf %177, %178 : vector<2x128xf32>
    %180 = vector.extract_strided_slice %176 {offsets = [0, 0], sizes = [2, 96], strides = [1, 1]} : vector<2x128xf32> to vector<2x96xf32>
    %181 = arith.negf %180 : vector<2x96xf32>
    %182 = math.exp %181 : vector<2x96xf32>
    %cst_42 = arith.constant 1.000000e+00 : f32
    %183 = vector.broadcast %cst_42 : f32 to vector<2x96xf32>
    %184 = arith.addf %183, %182 : vector<2x96xf32>
    %185 = arith.divf %183, %184 : vector<2x96xf32>
    %186 = vector.extract_strided_slice %176 {offsets = [0, 96], sizes = [2, 32], strides = [1, 1]} : vector<2x128xf32> to vector<2x32xf32>
    %187 = math.tanh %186 : vector<2x32xf32>
    %188 = vector.extract_strided_slice %185 {offsets = [0, 0], sizes = [2, 32], strides = [1, 1]} : vector<2x96xf32> to vector<2x32xf32>
    %189 = vector.extract_strided_slice %185 {offsets = [0, 32], sizes = [2, 32], strides = [1, 1]} : vector<2x96xf32> to vector<2x32xf32>
    %190 = vector.extract_strided_slice %185 {offsets = [0, 64], sizes = [2, 32], strides = [1, 1]} : vector<2x96xf32> to vector<2x32xf32>
    %191 = vector.extract_strided_slice %179 {offsets = [0, 0], sizes = [2, 96], strides = [1, 1]} : vector<2x128xf32> to vector<2x96xf32>
    %192 = arith.negf %191 : vector<2x96xf32>
    %193 = math.exp %192 : vector<2x96xf32>
    %cst_43 = arith.constant 1.000000e+00 : f32
    %194 = vector.broadcast %cst_43 : f32 to vector<2x96xf32>
    %195 = arith.addf %194, %193 : vector<2x96xf32>
    %196 = arith.divf %194, %195 : vector<2x96xf32>
    %197 = vector.extract_strided_slice %179 {offsets = [0, 96], sizes = [2, 32], strides = [1, 1]} : vector<2x128xf32> to vector<2x32xf32>
    %198 = math.tanh %197 : vector<2x32xf32>
    %199 = vector.extract_strided_slice %196 {offsets = [0, 0], sizes = [2, 32], strides = [1, 1]} : vector<2x96xf32> to vector<2x32xf32>
    %200 = vector.extract_strided_slice %196 {offsets = [0, 32], sizes = [2, 32], strides = [1, 1]} : vector<2x96xf32> to vector<2x32xf32>
    %201 = vector.extract_strided_slice %196 {offsets = [0, 64], sizes = [2, 32], strides = [1, 1]} : vector<2x96xf32> to vector<2x32xf32>
    %202 = arith.mulf %189, %164 : vector<2x32xf32>
    %203 = arith.mulf %188, %187 : vector<2x32xf32>
    %204 = arith.addf %202, %203 : vector<2x32xf32>
    %205 = math.tanh %204 : vector<2x32xf32>
    %206 = arith.mulf %190, %205 : vector<2x32xf32>
    %207 = arith.mulf %200, %169 : vector<2x32xf32>
    %208 = arith.mulf %199, %198 : vector<2x32xf32>
    %209 = arith.addf %207, %208 : vector<2x32xf32>
    %210 = math.tanh %209 : vector<2x32xf32>
    %211 = arith.mulf %201, %210 : vector<2x32xf32>
    %c8_44 = arith.constant 8 : index
    %c0_45 = arith.constant 0 : index
    %212 = vector.load %arg14[%c8_44, %c0_45] : memref<16x32xf32, #tpu.memory_space<vmem>>, vector<2x32xf32>
    tpu.vector_store %arg14[%c8_44, %c0_45], %206 {strides = array<i32>} : memref<16x32xf32, #tpu.memory_space<vmem>>, vector<2x32xf32>,
    %c6_46 = arith.constant 6 : index
    %c0_47 = arith.constant 0 : index
    %213 = vector.load %arg15[%c6_46, %c0_47] : memref<16x32xf32, #tpu.memory_space<vmem>>, vector<2x32xf32>
    tpu.vector_store %arg15[%c6_46, %c0_47], %211 {strides = array<i32>} : memref<16x32xf32, #tpu.memory_space<vmem>>, vector<2x32xf32>,
    %214 = vector.extract_strided_slice %5 {offsets = [10, 0], sizes = [2, 128], strides = [1, 1]} : vector<16x128xf32> to vector<2x128xf32>
    %cst_48 = arith.constant dense<0.000000e+00> : vector<2x128xf32>
    %215 = tpu.matmul %206, %11, %cst_48 {dimension_numbers = #tpu.dot_dimension_numbers<[1], [0], [0], [1], [0, 0, 1, 1], [], []>} : vector<2x32xf32>, vector<32x128xf32>, vector<2x128xf32> -> vector<2x128xf32>
    %216 = arith.addf %214, %215 : vector<2x128xf32>
    %217 = vector.extract_strided_slice %10 {offsets = [4, 0], sizes = [2, 128], strides = [1, 1]} : vector<16x128xf32> to vector<2x128xf32>
    %cst_49 = arith.constant dense<0.000000e+00> : vector<2x128xf32>
    %218 = tpu.matmul %211, %12, %cst_49 {dimension_numbers = #tpu.dot_dimension_numbers<[1], [0], [0], [1], [0, 0, 1, 1], [], []>} : vector<2x32xf32>, vector<32x128xf32>, vector<2x128xf32> -> vector<2x128xf32>
    %219 = arith.addf %217, %218 : vector<2x128xf32>
    %220 = vector.extract_strided_slice %216 {offsets = [0, 0], sizes = [2, 96], strides = [1, 1]} : vector<2x128xf32> to vector<2x96xf32>
    %221 = arith.negf %220 : vector<2x96xf32>
    %222 = math.exp %221 : vector<2x96xf32>
    %cst_50 = arith.constant 1.000000e+00 : f32
    %223 = vector.broadcast %cst_50 : f32 to vector<2x96xf32>
    %224 = arith.addf %223, %222 : vector<2x96xf32>
    %225 = arith.divf %223, %224 : vector<2x96xf32>
    %226 = vector.extract_strided_slice %216 {offsets = [0, 96], sizes = [2, 32], strides = [1, 1]} : vector<2x128xf32> to vector<2x32xf32>
    %227 = math.tanh %226 : vector<2x32xf32>
    %228 = vector.extract_strided_slice %225 {offsets = [0, 0], sizes = [2, 32], strides = [1, 1]} : vector<2x96xf32> to vector<2x32xf32>
    %229 = vector.extract_strided_slice %225 {offsets = [0, 32], sizes = [2, 32], strides = [1, 1]} : vector<2x96xf32> to vector<2x32xf32>
    %230 = vector.extract_strided_slice %225 {offsets = [0, 64], sizes = [2, 32], strides = [1, 1]} : vector<2x96xf32> to vector<2x32xf32>
    %231 = vector.extract_strided_slice %219 {offsets = [0, 0], sizes = [2, 96], strides = [1, 1]} : vector<2x128xf32> to vector<2x96xf32>
    %232 = arith.negf %231 : vector<2x96xf32>
    %233 = math.exp %232 : vector<2x96xf32>
    %cst_51 = arith.constant 1.000000e+00 : f32
    %234 = vector.broadcast %cst_51 : f32 to vector<2x96xf32>
    %235 = arith.addf %234, %233 : vector<2x96xf32>
    %236 = arith.divf %234, %235 : vector<2x96xf32>
    %237 = vector.extract_strided_slice %219 {offsets = [0, 96], sizes = [2, 32], strides = [1, 1]} : vector<2x128xf32> to vector<2x32xf32>
    %238 = math.tanh %237 : vector<2x32xf32>
    %239 = vector.extract_strided_slice %236 {offsets = [0, 0], sizes = [2, 32], strides = [1, 1]} : vector<2x96xf32> to vector<2x32xf32>
    %240 = vector.extract_strided_slice %236 {offsets = [0, 32], sizes = [2, 32], strides = [1, 1]} : vector<2x96xf32> to vector<2x32xf32>
    %241 = vector.extract_strided_slice %236 {offsets = [0, 64], sizes = [2, 32], strides = [1, 1]} : vector<2x96xf32> to vector<2x32xf32>
    %242 = arith.mulf %229, %204 : vector<2x32xf32>
    %243 = arith.mulf %228, %227 : vector<2x32xf32>
    %244 = arith.addf %242, %243 : vector<2x32xf32>
    %245 = math.tanh %244 : vector<2x32xf32>
    %246 = arith.mulf %230, %245 : vector<2x32xf32>
    %247 = arith.mulf %240, %209 : vector<2x32xf32>
    %248 = arith.mulf %239, %238 : vector<2x32xf32>
    %249 = arith.addf %247, %248 : vector<2x32xf32>
    %250 = math.tanh %249 : vector<2x32xf32>
    %251 = arith.mulf %241, %250 : vector<2x32xf32>
    %c10_52 = arith.constant 10 : index
    %c0_53 = arith.constant 0 : index
    %252 = vector.load %arg14[%c10_52, %c0_53] : memref<16x32xf32, #tpu.memory_space<vmem>>, vector<2x32xf32>
    tpu.vector_store %arg14[%c10_52, %c0_53], %246 {strides = array<i32>} : memref<16x32xf32, #tpu.memory_space<vmem>>, vector<2x32xf32>,
    %c4_54 = arith.constant 4 : index
    %c0_55 = arith.constant 0 : index
    %253 = vector.load %arg15[%c4_54, %c0_55] : memref<16x32xf32, #tpu.memory_space<vmem>>, vector<2x32xf32>
    tpu.vector_store %arg15[%c4_54, %c0_55], %251 {strides = array<i32>} : memref<16x32xf32, #tpu.memory_space<vmem>>, vector<2x32xf32>,
    %254 = vector.extract_strided_slice %5 {offsets = [12, 0], sizes = [2, 128], strides = [1, 1]} : vector<16x128xf32> to vector<2x128xf32>
    %cst_56 = arith.constant dense<0.000000e+00> : vector<2x128xf32>
    %255 = tpu.matmul %246, %11, %cst_56 {dimension_numbers = #tpu.dot_dimension_numbers<[1], [0], [0], [1], [0, 0, 1, 1], [], []>} : vector<2x32xf32>, vector<32x128xf32>, vector<2x128xf32> -> vector<2x128xf32>
    %256 = arith.addf %254, %255 : vector<2x128xf32>
    %257 = vector.extract_strided_slice %10 {offsets = [2, 0], sizes = [2, 128], strides = [1, 1]} : vector<16x128xf32> to vector<2x128xf32>
    %cst_57 = arith.constant dense<0.000000e+00> : vector<2x128xf32>
    %258 = tpu.matmul %251, %12, %cst_57 {dimension_numbers = #tpu.dot_dimension_numbers<[1], [0], [0], [1], [0, 0, 1, 1], [], []>} : vector<2x32xf32>, vector<32x128xf32>, vector<2x128xf32> -> vector<2x128xf32>
    %259 = arith.addf %257, %258 : vector<2x128xf32>
    %260 = vector.extract_strided_slice %256 {offsets = [0, 0], sizes = [2, 96], strides = [1, 1]} : vector<2x128xf32> to vector<2x96xf32>
    %261 = arith.negf %260 : vector<2x96xf32>
    %262 = math.exp %261 : vector<2x96xf32>
    %cst_58 = arith.constant 1.000000e+00 : f32
    %263 = vector.broadcast %cst_58 : f32 to vector<2x96xf32>
    %264 = arith.addf %263, %262 : vector<2x96xf32>
    %265 = arith.divf %263, %264 : vector<2x96xf32>
    %266 = vector.extract_strided_slice %256 {offsets = [0, 96], sizes = [2, 32], strides = [1, 1]} : vector<2x128xf32> to vector<2x32xf32>
    %267 = math.tanh %266 : vector<2x32xf32>
    %268 = vector.extract_strided_slice %265 {offsets = [0, 0], sizes = [2, 32], strides = [1, 1]} : vector<2x96xf32> to vector<2x32xf32>
    %269 = vector.extract_strided_slice %265 {offsets = [0, 32], sizes = [2, 32], strides = [1, 1]} : vector<2x96xf32> to vector<2x32xf32>
    %270 = vector.extract_strided_slice %265 {offsets = [0, 64], sizes = [2, 32], strides = [1, 1]} : vector<2x96xf32> to vector<2x32xf32>
    %271 = vector.extract_strided_slice %259 {offsets = [0, 0], sizes = [2, 96], strides = [1, 1]} : vector<2x128xf32> to vector<2x96xf32>
    %272 = arith.negf %271 : vector<2x96xf32>
    %273 = math.exp %272 : vector<2x96xf32>
    %cst_59 = arith.constant 1.000000e+00 : f32
    %274 = vector.broadcast %cst_59 : f32 to vector<2x96xf32>
    %275 = arith.addf %274, %273 : vector<2x96xf32>
    %276 = arith.divf %274, %275 : vector<2x96xf32>
    %277 = vector.extract_strided_slice %259 {offsets = [0, 96], sizes = [2, 32], strides = [1, 1]} : vector<2x128xf32> to vector<2x32xf32>
    %278 = math.tanh %277 : vector<2x32xf32>
    %279 = vector.extract_strided_slice %276 {offsets = [0, 0], sizes = [2, 32], strides = [1, 1]} : vector<2x96xf32> to vector<2x32xf32>
    %280 = vector.extract_strided_slice %276 {offsets = [0, 32], sizes = [2, 32], strides = [1, 1]} : vector<2x96xf32> to vector<2x32xf32>
    %281 = vector.extract_strided_slice %276 {offsets = [0, 64], sizes = [2, 32], strides = [1, 1]} : vector<2x96xf32> to vector<2x32xf32>
    %282 = arith.mulf %269, %244 : vector<2x32xf32>
    %283 = arith.mulf %268, %267 : vector<2x32xf32>
    %284 = arith.addf %282, %283 : vector<2x32xf32>
    %285 = math.tanh %284 : vector<2x32xf32>
    %286 = arith.mulf %270, %285 : vector<2x32xf32>
    %287 = arith.mulf %280, %249 : vector<2x32xf32>
    %288 = arith.mulf %279, %278 : vector<2x32xf32>
    %289 = arith.addf %287, %288 : vector<2x32xf32>
    %290 = math.tanh %289 : vector<2x32xf32>
    %291 = arith.mulf %281, %290 : vector<2x32xf32>
    %c12_60 = arith.constant 12 : index
    %c0_61 = arith.constant 0 : index
    %292 = vector.load %arg14[%c12_60, %c0_61] : memref<16x32xf32, #tpu.memory_space<vmem>>, vector<2x32xf32>
    tpu.vector_store %arg14[%c12_60, %c0_61], %286 {strides = array<i32>} : memref<16x32xf32, #tpu.memory_space<vmem>>, vector<2x32xf32>,
    %c2_62 = arith.constant 2 : index
    %c0_63 = arith.constant 0 : index
    %293 = vector.load %arg15[%c2_62, %c0_63] : memref<16x32xf32, #tpu.memory_space<vmem>>, vector<2x32xf32>
    tpu.vector_store %arg15[%c2_62, %c0_63], %291 {strides = array<i32>} : memref<16x32xf32, #tpu.memory_space<vmem>>, vector<2x32xf32>,
    %294 = vector.extract_strided_slice %5 {offsets = [14, 0], sizes = [2, 128], strides = [1, 1]} : vector<16x128xf32> to vector<2x128xf32>
    %cst_64 = arith.constant dense<0.000000e+00> : vector<2x128xf32>
    %295 = tpu.matmul %286, %11, %cst_64 {dimension_numbers = #tpu.dot_dimension_numbers<[1], [0], [0], [1], [0, 0, 1, 1], [], []>} : vector<2x32xf32>, vector<32x128xf32>, vector<2x128xf32> -> vector<2x128xf32>
    %296 = arith.addf %294, %295 : vector<2x128xf32>
    %297 = vector.extract_strided_slice %10 {offsets = [0, 0], sizes = [2, 128], strides = [1, 1]} : vector<16x128xf32> to vector<2x128xf32>
    %cst_65 = arith.constant dense<0.000000e+00> : vector<2x128xf32>
    %298 = tpu.matmul %291, %12, %cst_65 {dimension_numbers = #tpu.dot_dimension_numbers<[1], [0], [0], [1], [0, 0, 1, 1], [], []>} : vector<2x32xf32>, vector<32x128xf32>, vector<2x128xf32> -> vector<2x128xf32>
    %299 = arith.addf %297, %298 : vector<2x128xf32>
    %300 = vector.extract_strided_slice %296 {offsets = [0, 0], sizes = [2, 96], strides = [1, 1]} : vector<2x128xf32> to vector<2x96xf32>
    %301 = arith.negf %300 : vector<2x96xf32>
    %302 = math.exp %301 : vector<2x96xf32>
    %cst_66 = arith.constant 1.000000e+00 : f32
    %303 = vector.broadcast %cst_66 : f32 to vector<2x96xf32>
    %304 = arith.addf %303, %302 : vector<2x96xf32>
    %305 = arith.divf %303, %304 : vector<2x96xf32>
    %306 = vector.extract_strided_slice %296 {offsets = [0, 96], sizes = [2, 32], strides = [1, 1]} : vector<2x128xf32> to vector<2x32xf32>
    %307 = math.tanh %306 : vector<2x32xf32>
    %308 = vector.extract_strided_slice %305 {offsets = [0, 0], sizes = [2, 32], strides = [1, 1]} : vector<2x96xf32> to vector<2x32xf32>
    %309 = vector.extract_strided_slice %305 {offsets = [0, 32], sizes = [2, 32], strides = [1, 1]} : vector<2x96xf32> to vector<2x32xf32>
    %310 = vector.extract_strided_slice %305 {offsets = [0, 64], sizes = [2, 32], strides = [1, 1]} : vector<2x96xf32> to vector<2x32xf32>
    %311 = vector.extract_strided_slice %299 {offsets = [0, 0], sizes = [2, 96], strides = [1, 1]} : vector<2x128xf32> to vector<2x96xf32>
    %312 = arith.negf %311 : vector<2x96xf32>
    %313 = math.exp %312 : vector<2x96xf32>
    %cst_67 = arith.constant 1.000000e+00 : f32
    %314 = vector.broadcast %cst_67 : f32 to vector<2x96xf32>
    %315 = arith.addf %314, %313 : vector<2x96xf32>
    %316 = arith.divf %314, %315 : vector<2x96xf32>
    %317 = vector.extract_strided_slice %299 {offsets = [0, 96], sizes = [2, 32], strides = [1, 1]} : vector<2x128xf32> to vector<2x32xf32>
    %318 = math.tanh %317 : vector<2x32xf32>
    %319 = vector.extract_strided_slice %316 {offsets = [0, 0], sizes = [2, 32], strides = [1, 1]} : vector<2x96xf32> to vector<2x32xf32>
    %320 = vector.extract_strided_slice %316 {offsets = [0, 32], sizes = [2, 32], strides = [1, 1]} : vector<2x96xf32> to vector<2x32xf32>
    %321 = vector.extract_strided_slice %316 {offsets = [0, 64], sizes = [2, 32], strides = [1, 1]} : vector<2x96xf32> to vector<2x32xf32>
    %322 = arith.mulf %309, %284 : vector<2x32xf32>
    %323 = arith.mulf %308, %307 : vector<2x32xf32>
    %324 = arith.addf %322, %323 : vector<2x32xf32>
    %325 = math.tanh %324 : vector<2x32xf32>
    %326 = arith.mulf %310, %325 : vector<2x32xf32>
    %327 = arith.mulf %320, %289 : vector<2x32xf32>
    %328 = arith.mulf %319, %318 : vector<2x32xf32>
    %329 = arith.addf %327, %328 : vector<2x32xf32>
    %330 = math.tanh %329 : vector<2x32xf32>
    %331 = arith.mulf %321, %330 : vector<2x32xf32>
    %c14_68 = arith.constant 14 : index
    %c0_69 = arith.constant 0 : index
    %332 = vector.load %arg14[%c14_68, %c0_69] : memref<16x32xf32, #tpu.memory_space<vmem>>, vector<2x32xf32>
    tpu.vector_store %arg14[%c14_68, %c0_69], %326 {strides = array<i32>} : memref<16x32xf32, #tpu.memory_space<vmem>>, vector<2x32xf32>,
    %c0_70 = arith.constant 0 : index
    %c0_71 = arith.constant 0 : index
    %333 = vector.load %arg15[%c0_70, %c0_71] : memref<16x32xf32, #tpu.memory_space<vmem>>, vector<2x32xf32>
    tpu.vector_store %arg15[%c0_70, %c0_71], %331 {strides = array<i32>} : memref<16x32xf32, #tpu.memory_space<vmem>>, vector<2x32xf32>,
    %c0_72 = arith.constant 0 : index
    %c0_73 = arith.constant 0 : index
    %334 = vector.load %arg14[%c0_72, %c0_73] : memref<16x32xf32, #tpu.memory_space<vmem>>, vector<16x32xf32>
    %c0_74 = arith.constant 0 : index
    %c0_75 = arith.constant 0 : index
    %335 = vector.load %arg15[%c0_74, %c0_75] : memref<16x32xf32, #tpu.memory_space<vmem>>, vector<16x32xf32>
    %336 = arith.addf %334, %335 : vector<16x32xf32>
    %c0_76 = arith.constant 0 : index
    %c0_77 = arith.constant 0 : index
    %337 = vector.load %arg10[%c0_76, %c0_77] : memref<16x32xf32, #tpu.memory_space<vmem>>, vector<16x32xf32>
    tpu.vector_store %arg10[%c0_76, %c0_77], %336 {strides = array<i32>} : memref<16x32xf32, #tpu.memory_space<vmem>>, vector<16x32xf32>,
    %c0_78 = arith.constant 0 : index
    %c0_79 = arith.constant 0 : index
    %338 = vector.load %arg8[%c0_78, %c0_79] : memref<32x32xf32, #tpu.memory_space<vmem>>, vector<32x32xf32>
    %cst_80 = arith.constant dense<0.000000e+00> : vector<16x32xf32>
    %339 = tpu.matmul %336, %338, %cst_80 {dimension_numbers = #tpu.dot_dimension_numbers<[1], [0], [0], [1], [0, 0, 1, 1], [], []>} : vector<16x32xf32>, vector<32x32xf32>, vector<16x32xf32> -> vector<16x32xf32>
    %c0_81 = arith.constant 0 : index
    %c0_82 = arith.constant 0 : index
    %340 = vector.load %arg9[%c0_81, %c0_82] : memref<1x32xf32, #tpu.memory_space<vmem>>, vector<1x32xf32>
    %341 = vector.broadcast %340 : vector<1x32xf32> to vector<16x32xf32>
    %342 = arith.addf %339, %341 : vector<16x32xf32>
    %c0_83 = arith.constant 0 : index
    %c0_84 = arith.constant 0 : index
    %343 = vector.load %arg11[%c0_83, %c0_84] : memref<16x32xf32, #tpu.memory_space<vmem>>, vector<16x32xf32>
    tpu.vector_store %arg11[%c0_83, %c0_84], %342 {strides = array<i32>} : memref<16x32xf32, #tpu.memory_space<vmem>>, vector<16x32xf32>,
    %344 = arith.addf %326, %331 : vector<2x32xf32>
    %c0_85 = arith.constant 0 : index
    %c0_86 = arith.constant 0 : index
    %345 = vector.load %arg12[%c0_85, %c0_86] : memref<2x32xf32, #tpu.memory_space<vmem>>, vector<2x32xf32>
    tpu.vector_store %arg12[%c0_85, %c0_86], %344 {strides = array<i32>} : memref<2x32xf32, #tpu.memory_space<vmem>>, vector<2x32xf32>,
    %346 = arith.addf %324, %329 : vector<2x32xf32>
    %c0_87 = arith.constant 0 : index
    %c0_88 = arith.constant 0 : index
    %347 = vector.load %arg13[%c0_87, %c0_88] : memref<2x32xf32, #tpu.memory_space<vmem>>, vector<2x32xf32>
    tpu.vector_store %arg13[%c0_87, %c0_88], %346 {strides = array<i32>} : memref<2x32xf32, #tpu.memory_space<vmem>>, vector<2x32xf32>,
    return
  }
  func.func @transform_0(%arg0: i32) -> (i32, i32) {
    %c0_i32 = arith.constant 0 : i32
    %c0_i32_0 = arith.constant 0 : i32
    %c0_i32_1 = arith.constant 0 : i32
    return %c0_i32, %c0_i32_0 : i32, i32
  }
  func.func @transform_1(%arg0: i32) -> (i32, i32) {
    %c0_i32 = arith.constant 0 : i32
    %c0_i32_0 = arith.constant 0 : i32
    %c0_i32_1 = arith.constant 0 : i32
    return %c0_i32, %c0_i32_0 : i32, i32
  }
  func.func @transform_2(%arg0: i32) -> (i32, i32) {
    %c0_i32 = arith.constant 0 : i32
    %c0_i32_0 = arith.constant 0 : i32
    %c0_i32_1 = arith.constant 0 : i32
    return %c0_i32, %c0_i32_0 : i32, i32
  }
  func.func @transform_3(%arg0: i32) -> (i32, i32) {
    %c0_i32 = arith.constant 0 : i32
    %c0_i32_0 = arith.constant 0 : i32
    %c0_i32_1 = arith.constant 0 : i32
    return %c0_i32, %c0_i32_0 : i32, i32
  }
  func.func @transform_4(%arg0: i32) -> (i32, i32) {
    %c0_i32 = arith.constant 0 : i32
    %c0_i32_0 = arith.constant 0 : i32
    %c0_i32_1 = arith.constant 0 : i32
    return %c0_i32, %c0_i32_0 : i32, i32
  }
  func.func @transform_5(%arg0: i32) -> (i32, i32) {
    %c0_i32 = arith.constant 0 : i32
    %c0_i32_0 = arith.constant 0 : i32
    %c0_i32_1 = arith.constant 0 : i32
    return %c0_i32, %c0_i32_0 : i32, i32
  }
  func.func @transform_6(%arg0: i32) -> (i32, i32) {
    %c0_i32 = arith.constant 0 : i32
    %c0_i32_0 = arith.constant 0 : i32
    %c0_i32_1 = arith.constant 0 : i32
    return %c0_i32, %c0_i32_0 : i32, i32
  }
  func.func @transform_7(%arg0: i32) -> (i32, i32) {
    %c0_i32 = arith.constant 0 : i32
    %c0_i32_0 = arith.constant 0 : i32
    %c0_i32_1 = arith.constant 0 : i32
    return %c0_i32, %c0_i32_0 : i32, i32
  }
  func.func @transform_8(%arg0: i32) -> (i32, i32) {
    %c0_i32 = arith.constant 0 : i32
    %c0_i32_0 = arith.constant 0 : i32
    %c0_i32_1 = arith.constant 0 : i32
    return %c0_i32, %c0_i32_0 : i32, i32
  }
  func.func @transform_9(%arg0: i32) -> (i32, i32) {
    %c0_i32 = arith.constant 0 : i32
    %c0_i32_0 = arith.constant 0 : i32
    %c0_i32_1 = arith.constant 0 : i32
    return %c0_i32, %c0_i32_0 : i32, i32
  }
  func.func @transform_10(%arg0: i32) -> (i32, i32) {
    %c0_i32 = arith.constant 0 : i32
    %c0_i32_0 = arith.constant 0 : i32
    %c0_i32_1 = arith.constant 0 : i32
    return %c0_i32, %c0_i32_0 : i32, i32
  }
  func.func @transform_11(%arg0: i32) -> (i32, i32) {
    %c0_i32 = arith.constant 0 : i32
    %c0_i32_0 = arith.constant 0 : i32
    %c0_i32_1 = arith.constant 0 : i32
    return %c0_i32, %c0_i32_0 : i32, i32
  }
  func.func @transform_12(%arg0: i32) -> (i32, i32) {
    %c0_i32 = arith.constant 0 : i32
    %c0_i32_0 = arith.constant 0 : i32
    %c0_i32_1 = arith.constant 0 : i32
    return %c0_i32, %c0_i32_0 : i32, i32
  }
}

</mosaic_0001>

<llo_original>
// kernel: encoder_forward.1
$region0: #{encoder_forward.1}
  #allocation0 [shape = 'u32[]', space=smem, size = 0x4, offset = 0x4, fixed_abs, tag = 'smem constant byte address 0x4 - core index']
  #allocation1 [shape = 'u32[144,128]{1,0:T(1,128)}', space=vmem, size = 0x12000, scoped, tag = 'internal scratch']
  #allocation2 [shape = 'f32[16,32]{1,0:T(8,128)}', space=vmem, size = 0x2000, scoped, tag = 'scratch operand']
  #allocation3 [shape = 'f32[16,32]{1,0:T(8,128)}', space=vmem, size = 0x2000, scoped, tag = 'scratch operand']
  %s0 = inlined_call_operand.vmem [shape: f32[16,32], index: 0, kind: input, shape index: {}]
  %s1 = inlined_call_operand.vmem [shape: f32[32,128], index: 1, kind: input, shape index: {}]
  %s2 = inlined_call_operand.vmem [shape: f32[32,128], index: 2, kind: input, shape index: {}]
  %s3 = inlined_call_operand.vmem [shape: f32[1,128], index: 3, kind: input, shape index: {}]
  %s4 = inlined_call_operand.vmem [shape: f32[32,128], index: 4, kind: input, shape index: {}]
  %s5 = inlined_call_operand.vmem [shape: f32[32,128], index: 5, kind: input, shape index: {}]
  %s6 = inlined_call_operand.vmem [shape: f32[1,128], index: 6, kind: input, shape index: {}]
  %s7 = inlined_call_operand.vmem [shape: f32[32,32], index: 7, kind: input, shape index: {}]
  %s8 = inlined_call_operand.vmem [shape: f32[1,32], index: 8, kind: input, shape index: {}]
  %s9 = inlined_call_operand.hbm [shape: f32[16,32], index: 9, kind: output, shape index: {0}]
  %s10 = inlined_call_operand.hbm [shape: f32[16,32], index: 10, kind: output, shape index: {1}]
  %s11 = inlined_call_operand.hbm [shape: f32[2,32], index: 11, kind: output, shape index: {2}]
  %s12 = inlined_call_operand.hbm [shape: f32[2,32], index: 12, kind: output, shape index: {3}]
  %13 = xla_tuple %s9, %s10, %s11, %s12
  %s14 = sld [smem:[#allocation0]]
  $region70: #{encoder_forward.1} parent=0
    _
  %s16 = ssub.s32 1, %s14
  %s17 = scalar_select 0, %s16, %s14
  $region1: #{encoder_forward.1} parent=0
    #allocation4 [shape = 'u8[8192]{0}', space=vmem, size = 0x2000, scoped, tag = 'output window, operand 0, single buffered']
    #allocation5 [shape = 's32[1]{0}', space=sflag, size = 0x4, scoped, tag = 'scoped memory for encoder_forward.1']
    #allocation6 [shape = 'u8[8192]{0}', space=vmem, size = 0x2000, scoped, tag = 'output window, operand 1, single buffered']
    #allocation7 [shape = 's32[1]{0}', space=sflag, size = 0x4, scoped, tag = 'scoped memory for encoder_forward.1']
    #allocation8 [shape = 'u8[1024]{0}', space=vmem, size = 0x400, scoped, tag = 'output window, operand 2, single buffered']
    #allocation9 [shape = 'u8[1024]{0}', space=vmem, size = 0x400, scoped, tag = 'output window, operand 3, single buffered']
    #allocation10 [shape = 's32[1]{0}', space=sflag, size = 0x4, scoped, tag = 'scoped memory for encoder_forward.1']
    %18 = vsyncpa [#allocation5], 0
    %19 = vsyncpa [#allocation7], 0
    %20 = vsyncpa [#allocation10], 0
    // Predicated region
    $region2: #{encoder_forward.1} parent=1 // pred_check
      _
    $region3: #{encoder_forward.1} parent=1 // pred_check_branch
      %22 = sbr.rel (0) target = $region5
    $region4: #{encoder_forward.1} parent=1 // pred_region
      _
    $region5: #{encoder_forward.1} parent=1 // pred_fallthru
      _
    // Predicated region
    $region6: #{encoder_forward.1} parent=1 // pred_check
      _
    $region7: #{encoder_forward.1} parent=1 // pred_check_branch
      %24 = sbr.rel (0) target = $region9
    $region8: #{encoder_forward.1} parent=1 // pred_region
      _
    $region9: #{encoder_forward.1} parent=1 // pred_fallthru
      _
    // Predicated region
    $region10: #{encoder_forward.1} parent=1 // pred_check
      _
    $region11: #{encoder_forward.1} parent=1 // pred_check_branch
      %26 = sbr.rel (0) target = $region13
    $region12: #{encoder_forward.1} parent=1 // pred_region
      _
    $region13: #{encoder_forward.1} parent=1 // pred_fallthru
      _
    // Predicated region
    $region14: #{encoder_forward.1} parent=1 // pred_check
      _
    $region15: #{encoder_forward.1} parent=1 // pred_check_branch
      %28 = sbr.rel (0) target = $region17
    $region16: #{encoder_forward.1} parent=1 // pred_region
      _
    $region17: #{encoder_forward.1} parent=1 // pred_fallthru
      _
    // Predicated region
    $region18: #{encoder_forward.1} parent=1 // pred_check
      _
    $region19: #{encoder_forward.1} parent=1 // pred_check_branch
      %30 = sbr.rel (0) target = $region21
    $region20: #{encoder_forward.1} parent=1 // pred_region
      _
    $region21: #{encoder_forward.1} parent=1 // pred_fallthru
      _
    // Predicated region
    $region22: #{encoder_forward.1} parent=1 // pred_check
      _
    $region23: #{encoder_forward.1} parent=1 // pred_check_branch
      %32 = sbr.rel (0) target = $region25
    $region24: #{encoder_forward.1} parent=1 // pred_region
      _
    $region25: #{encoder_forward.1} parent=1 // pred_fallthru
      _
    // Predicated region
    $region26: #{encoder_forward.1} parent=1 // pred_check
      _
    $region27: #{encoder_forward.1} parent=1 // pred_check_branch
      %34 = sbr.rel (0) target = $region29
    $region28: #{encoder_forward.1} parent=1 // pred_region
      _
    $region29: #{encoder_forward.1} parent=1 // pred_fallthru
      _
    // Predicated region
    $region30: #{encoder_forward.1} parent=1 // pred_check
      _
    $region31: #{encoder_forward.1} parent=1 // pred_check_branch
      %36 = sbr.rel (0) target = $region33
    $region32: #{encoder_forward.1} parent=1 // pred_region
      _
    $region33: #{encoder_forward.1} parent=1 // pred_fallthru
      _
    // Predicated region
    $region34: #{encoder_forward.1} parent=1 // pred_check
      _
    $region35: #{encoder_forward.1} parent=1 // pred_check_branch
      %38 = sbr.rel (0) target = $region37
    $region36: #{encoder_forward.1} parent=1 // pred_region
      _
    $region37: #{encoder_forward.1} parent=1 // pred_fallthru
      _
    %v39 = vld [vmem:[%s0] sm:$0xff]
    %v40 = vld [vmem:[%s0 + $0x8] sm:$0xff]
    %v41 = vld [vmem:[%s1] sm:$0xff]
    %v42 = vld [vmem:[%s1 + $0x8] sm:$0xff]
    %v43 = vld [vmem:[%s1 + $0x10] sm:$0xff]
    %v44 = vld [vmem:[%s1 + $0x18] sm:$0xff]
    %v45 = vld [vmem:[%s3] sm:$0x1]
    %v47 = vlaneseq
    %v48 = vshrl.u32 %v47, 7
    %v49 = vsub.s32 0, %v48
    %v50 = vrot.slane %v45, %v49
    %vm52 = vcmask 261120
    %v54 = vsel %vm52, %v39, 0
    %v57 = vsel %vm52, %v40, 0
    %59 = vmatprep.subr.mxu0 0.0
    %60 = vmatpush1.msra.mxu0 %v41
    %61 = vmatprep.subr.mxu0 0.0
    %62 = vmatpush1.msra.mxu0 %v42
    %63 = vmatprep.subr.mxu0 0.0
    %64 = vmatpush1.msra.mxu0 %v43
    %65 = vmatprep.subr.mxu0 0.0
    %66 = vmatpush1.msra.mxu0 %v44
    %67 = vmatprep.subr.mxu0 0.0
    %68 = vmatpush1.msra.mxu0 0.0
    %69 = vmatprep.subr.mxu0 0.0
    %70 = vmatpush1.msra.mxu0 0.0
    %71 = vmatprep.subr.mxu0 0.0
    %72 = vmatpush1.msra.mxu0 0.0
    %73 = vmatprep.subr.mxu0 0.0
    %74 = vmatpush1.msra.mxu0 0.0
    %75 = vmatprep.subr.mxu0 0.0
    %76 = vmatpush1.msra.mxu0 0.0
    %77 = vmatprep.subr.mxu0 0.0
    %78 = vmatpush1.msra.mxu0 0.0
    %79 = vmatprep.subr.mxu0 0.0
    %80 = vmatpush1.msra.mxu0 0.0
    %81 = vmatprep.subr.mxu0 0.0
    %82 = vmatpush1.msra.mxu0 0.0
    %83 = vmatprep.subr.mxu0 0.0
    %84 = vmatpush1.msra.mxu0 0.0
    %85 = vmatprep.subr.mxu0 0.0
    %86 = vmatpush1.msra.mxu0 0.0
    %87 = vmatprep.subr.mxu0 0.0
    %88 = vmatpush1.msra.mxu0 0.0
    %89 = vmatprep.subr.mxu0 0.0
    %90 = vmatpush1.msra.mxu0 0.0
    %91 = vmatprep.subr.mxu0 0.0
    %92 = vmatpush1.msra.mxu0 0.0
    %93 = vmatprep.subr.mxu0 0.0
    %94 = vmatpush1.msra.mxu0 0.0
    %95 = vmatprep.subr.mxu0 0.0
    %96 = vmatpush1.msra.mxu0 0.0
    %97 = vmatprep.subr.mxu0 0.0
    %98 = vmatpush1.msra.mxu0 0.0
    %99 = vmatprep.subr.mxu0 0.0
    %100 = vmatpush1.msra.mxu0 0.0
    %101 = vmatprep.subr.mxu0 0.0
    %102 = vmatpush1.msra.mxu0 0.0
    %103 = vmatprep.subr.mxu0 0.0
    %104 = vmatpush1.msra.mxu0 0.0
    %105 = vmatprep.subr.mxu0 0.0
    %106 = vmatpush1.msra.mxu0 0.0
    %107 = vmatprep.subr.mxu0 0.0
    %108 = vmatpush1.msra.mxu0 0.0
    %109 = vmatprep.subr.mxu0 0.0
    %110 = vmatpush1.msra.mxu0 0.0
    %111 = vmatprep.subr.mxu0 0.0
    %112 = vmatpush1.msra.mxu0 0.0
    %113 = vmatprep.subr.mxu0 0.0
    %114 = vmatpush1.msra.mxu0 0.0
    %115 = vmatprep.subr.mxu0 0.0
    %116 = vmatpush1.msra.mxu0 0.0
    %117 = vmatprep.subr.mxu0 0.0
    %118 = vmatpush1.msra.mxu0 0.0
    %119 = vmatprep.subr.mxu0 0.0
    %120 = vmatpush1.msra.mxu0 0.0
    %121 = vmatprep.subr.mxu0 0.0
    %122 = vmatpush1.msra.mxu0 0.0
    %123 = vmatprep.mubr.f32.mxu0 0.0
    %124 = vmatmul.mubr.f32.gmra.mrb[0].mxu0 %v54
    %v125 = vpop.f32.mrb[0].mxu0
    %v126 = vadd.f32 %v50, %v125
    %v127 = vpop.f32.mrb[0].mxu0
    %128 = vmatprep.mubr.f32.mxu0 0.0
    %129 = vmatmul.mubr.f32.gmra.mrb[0].mxu0 %v57
    %v130 = vpop.f32.mrb[0].mxu0
    %v131 = vadd.f32 %v50, %v130
    %v132 = vpop.f32.mrb[0].mxu0
    %133 = vdwg.mxu0
    %v134 = vld [vmem:[%s4] sm:$0xff]
    %v135 = vld [vmem:[%s4 + $0x8] sm:$0xff]
    %v136 = vld [vmem:[%s4 + $0x10] sm:$0xff]
    %v137 = vld [vmem:[%s4 + $0x18] sm:$0xff]
    %v138 = vld [vmem:[%s6] sm:$0x1]
    %v140 = vlaneseq
    %v141 = vshrl.u32 %v140, 7
    %v142 = vsub.s32 0, %v141
    %v143 = vrot.slane %v138, %v142
    %145 = vmatprep.subr.mxu0 0.0
    %146 = vmatpush1.msra.mxu0 %v134
    %147 = vmatprep.subr.mxu0 0.0
    %148 = vmatpush1.msra.mxu0 %v135
    %149 = vmatprep.subr.mxu0 0.0
    %150 = vmatpush1.msra.mxu0 %v136
    %151 = vmatprep.subr.mxu0 0.0
    %152 = vmatpush1.msra.mxu0 %v137
    %153 = vmatprep.subr.mxu0 0.0
    %154 = vmatpush1.msra.mxu0 0.0
    %155 = vmatprep.subr.mxu0 0.0
    %156 = vmatpush1.msra.mxu0 0.0
    %157 = vmatprep.subr.mxu0 0.0
    %158 = vmatpush1.msra.mxu0 0.0
    %159 = vmatprep.subr.mxu0 0.0
    %160 = vmatpush1.msra.mxu0 0.0
    %161 = vmatprep.subr.mxu0 0.0
    %162 = vmatpush1.msra.mxu0 0.0
    %163 = vmatprep.subr.mxu0 0.0
    %164 = vmatpush1.msra.mxu0 0.0
    %165 = vmatprep.subr.mxu0 0.0
    %166 = vmatpush1.msra.mxu0 0.0
    %167 = vmatprep.subr.mxu0 0.0
    %168 = vmatpush1.msra.mxu0 0.0
    %169 = vmatprep.subr.mxu0 0.0
    %170 = vmatpush1.msra.mxu0 0.0
    %171 = vmatprep.subr.mxu0 0.0
    %172 = vmatpush1.msra.mxu0 0.0
    %173 = vmatprep.subr.mxu0 0.0
    %174 = vmatpush1.msra.mxu0 0.0
    %175 = vmatprep.subr.mxu0 0.0
    %176 = vmatpush1.msra.mxu0 0.0
    %177 = vmatprep.subr.mxu0 0.0
    %178 = vmatpush1.msra.mxu0 0.0
    %179 = vmatprep.subr.mxu0 0.0
    %180 = vmatpush1.msra.mxu0 0.0
    %181 = vmatprep.subr.mxu0 0.0
    %182 = vmatpush1.msra.mxu0 0.0
    %183 = vmatprep.subr.mxu0 0.0
    %184 = vmatpush1.msra.mxu0 0.0
    %185 = vmatprep.subr.mxu0 0.0
    %186 = vmatpush1.msra.mxu0 0.0
    %187 = vmatprep.subr.mxu0 0.0
    %188 = vmatpush1.msra.mxu0 0.0
    %189 = vmatprep.subr.mxu0 0.0
    %190 = vmatpush1.msra.mxu0 0.0
    %191 = vmatprep.subr.mxu0 0.0
    %192 = vmatpush1.msra.mxu0 0.0
    %193 = vmatprep.subr.mxu0 0.0
    %194 = vmatpush1.msra.mxu0 0.0
    %195 = vmatprep.subr.mxu0 0.0
    %196 = vmatpush1.msra.mxu0 0.0
    %197 = vmatprep.subr.mxu0 0.0
    %198 = vmatpush1.msra.mxu0 0.0
    %199 = vmatprep.subr.mxu0 0.0
    %200 = vmatpush1.msra.mxu0 0.0
    %201 = vmatprep.subr.mxu0 0.0
    %202 = vmatpush1.msra.mxu0 0.0
    %203 = vmatprep.subr.mxu0 0.0
    %204 = vmatpush1.msra.mxu0 0.0
    %205 = vmatprep.subr.mxu0 0.0
    %206 = vmatpush1.msra.mxu0 0.0
    %207 = vmatprep.subr.mxu0 0.0
    %208 = vmatpush1.msra.mxu0 0.0
    %209 = vmatprep.mubr.f32.mxu0 0.0
    %210 = vmatmul.mubr.f32.gmra.mrb[0].mxu0 %v54
    %v211 = vpop.f32.mrb[0].mxu0
    %v212 = vadd.f32 %v143, %v211
    %v213 = vpop.f32.mrb[0].mxu0
    %214 = vmatprep.mubr.f32.mxu0 0.0
    %215 = vmatmul.mubr.f32.gmra.mrb[0].mxu0 %v57
    %v216 = vpop.f32.mrb[0].mxu0
    %v217 = vadd.f32 %v143, %v216
    %v218 = vpop.f32.mrb[0].mxu0
    %219 = vdwg.mxu0
    %v220 = vld [vmem:[%s2] sm:$0xff]
    %v221 = vld [vmem:[%s2 + $0x8] sm:$0xff]
    %v222 = vld [vmem:[%s2 + $0x10] sm:$0xff]
    %v223 = vld [vmem:[%s2 + $0x18] sm:$0xff]
    %v224 = vld [vmem:[%s5] sm:$0xff]
    %v225 = vld [vmem:[%s5 + $0x8] sm:$0xff]
    %v226 = vld [vmem:[%s5 + $0x10] sm:$0xff]
    %v227 = vld [vmem:[%s5 + $0x18] sm:$0xff]
    %v229 = vsel %vm52, 0.0, 0
    %231 = vmatprep.subr.mxu0 0.0
    %232 = vmatpush1.msra.mxu0 %v220
    %233 = vmatprep.subr.mxu0 0.0
    %234 = vmatpush1.msra.mxu0 %v221
    %235 = vmatprep.subr.mxu0 0.0
    %236 = vmatpush1.msra.mxu0 %v222
    %237 = vmatprep.subr.mxu0 0.0
    %238 = vmatpush1.msra.mxu0 %v223
    %239 = vmatprep.subr.mxu0 0.0
    %240 = vmatpush1.msra.mxu0 0.0
    %241 = vmatprep.subr.mxu0 0.0
    %242 = vmatpush1.msra.mxu0 0.0
    %243 = vmatprep.subr.mxu0 0.0
    %244 = vmatpush1.msra.mxu0 0.0
    %245 = vmatprep.subr.mxu0 0.0
    %246 = vmatpush1.msra.mxu0 0.0
    %247 = vmatprep.subr.mxu0 0.0
    %248 = vmatpush1.msra.mxu0 0.0
    %249 = vmatprep.subr.mxu0 0.0
    %250 = vmatpush1.msra.mxu0 0.0
    %251 = vmatprep.subr.mxu0 0.0
    %252 = vmatpush1.msra.mxu0 0.0
    %253 = vmatprep.subr.mxu0 0.0
    %254 = vmatpush1.msra.mxu0 0.0
    %255 = vmatprep.subr.mxu0 0.0
    %256 = vmatpush1.msra.mxu0 0.0
    %257 = vmatprep.subr.mxu0 0.0
    %258 = vmatpush1.msra.mxu0 0.0
    %259 = vmatprep.subr.mxu0 0.0
    %260 = vmatpush1.msra.mxu0 0.0
    %261 = vmatprep.subr.mxu0 0.0
    %262 = vmatpush1.msra.mxu0 0.0
    %263 = vmatprep.subr.mxu0 0.0
    %264 = vmatpush1.msra.mxu0 0.0
    %265 = vmatprep.subr.mxu0 0.0
    %266 = vmatpush1.msra.mxu0 0.0
    %267 = vmatprep.subr.mxu0 0.0
    %268 = vmatpush1.msra.mxu0 0.0
    %269 = vmatprep.subr.mxu0 0.0
    %270 = vmatpush1.msra.mxu0 0.0
    %271 = vmatprep.subr.mxu0 0.0
    %272 = vmatpush1.msra.mxu0 0.0
    %273 = vmatprep.subr.mxu0 0.0
    %274 = vmatpush1.msra.mxu0 0.0
    %275 = vmatprep.subr.mxu0 0.0
    %276 = vmatpush1.msra.mxu0 0.0
    %277 = vmatprep.subr.mxu0 0.0
    %278 = vmatpush1.msra.mxu0 0.0
    %279 = vmatprep.subr.mxu0 0.0
    %280 = vmatpush1.msra.mxu0 0.0
    %281 = vmatprep.subr.mxu0 0.0
    %282 = vmatpush1.msra.mxu0 0.0
    %283 = vmatprep.subr.mxu0 0.0
    %284 = vmatpush1.msra.mxu0 0.0
    %285 = vmatprep.subr.mxu0 0.0
    %286 = vmatpush1.msra.mxu0 0.0
    %287 = vmatprep.subr.mxu0 0.0
    %288 = vmatpush1.msra.mxu0 0.0
    %289 = vmatprep.subr.mxu0 0.0
    %290 = vmatpush1.msra.mxu0 0.0
    %291 = vmatprep.subr.mxu0 0.0
    %292 = vmatpush1.msra.mxu0 0.0
    %293 = vmatprep.subr.mxu0 0.0
    %294 = vmatpush1.msra.mxu0 0.0
    %295 = vmatprep.mubr.f32.mxu0 0.0
    %296 = vmatmul.mubr.f32.gmra.mrb[0].mxu0 %v229
    %v297 = vpop.f32.mrb[0].mxu0
    %v298 = vadd.f32 0.0, %v297
    %v299 = vpop.f32.mrb[0].mxu0
    %300 = vdwg.mxu0
    %v301 = vadd.f32 %v126, %v298
    %302 = vmatprep.subr.mxu0 0.0
    %303 = vmatpush1.msra.mxu0 %v224
    %304 = vmatprep.subr.mxu0 0.0
    %305 = vmatpush1.msra.mxu0 %v225
    %306 = vmatprep.subr.mxu0 0.0
    %307 = vmatpush1.msra.mxu0 %v226
    %308 = vmatprep.subr.mxu0 0.0
    %309 = vmatpush1.msra.mxu0 %v227
    %310 = vmatprep.subr.mxu0 0.0
    %311 = vmatpush1.msra.mxu0 0.0
    %312 = vmatprep.subr.mxu0 0.0
    %313 = vmatpush1.msra.mxu0 0.0
    %314 = vmatprep.subr.mxu0 0.0
    %315 = vmatpush1.msra.mxu0 0.0
    %316 = vmatprep.subr.mxu0 0.0
    %317 = vmatpush1.msra.mxu0 0.0
    %318 = vmatprep.subr.mxu0 0.0
    %319 = vmatpush1.msra.mxu0 0.0
    %320 = vmatprep.subr.mxu0 0.0
    %321 = vmatpush1.msra.mxu0 0.0
    %322 = vmatprep.subr.mxu0 0.0
    %323 = vmatpush1.msra.mxu0 0.0
    %324 = vmatprep.subr.mxu0 0.0
    %325 = vmatpush1.msra.mxu0 0.0
    %326 = vmatprep.subr.mxu0 0.0
    %327 = vmatpush1.msra.mxu0 0.0
    %328 = vmatprep.subr.mxu0 0.0
    %329 = vmatpush1.msra.mxu0 0.0
    %330 = vmatprep.subr.mxu0 0.0
    %331 = vmatpush1.msra.mxu0 0.0
    %332 = vmatprep.subr.mxu0 0.0
    %333 = vmatpush1.msra.mxu0 0.0
    %334 = vmatprep.subr.mxu0 0.0
    %335 = vmatpush1.msra.mxu0 0.0
    %336 = vmatprep.subr.mxu0 0.0
    %337 = vmatpush1.msra.mxu0 0.0
    %338 = vmatprep.subr.mxu0 0.0
    %339 = vmatpush1.msra.mxu0 0.0
    %340 = vmatprep.subr.mxu0 0.0
    %341 = vmatpush1.msra.mxu0 0.0
    %342 = vmatprep.subr.mxu0 0.0
    %343 = vmatpush1.msra.mxu0 0.0
    %344 = vmatprep.subr.mxu0 0.0
    %345 = vmatpush1.msra.mxu0 0.0
    %346 = vmatprep.subr.mxu0 0.0
    %347 = vmatpush1.msra.mxu0 0.0
    %348 = vmatprep.subr.mxu0 0.0
    %349 = vmatpush1.msra.mxu0 0.0
    %350 = vmatprep.subr.mxu0 0.0
    %351 = vmatpush1.msra.mxu0 0.0
    %352 = vmatprep.subr.mxu0 0.0
    %353 = vmatpush1.msra.mxu0 0.0
    %354 = vmatprep.subr.mxu0 0.0
    %355 = vmatpush1.msra.mxu0 0.0
    %356 = vmatprep.subr.mxu0 0.0
    %357 = vmatpush1.msra.mxu0 0.0
    %358 = vmatprep.subr.mxu0 0.0
    %359 = vmatpush1.msra.mxu0 0.0
    %360 = vmatprep.subr.mxu0 0.0
    %361 = vmatpush1.msra.mxu0 0.0
    %362 = vmatprep.subr.mxu0 0.0
    %363 = vmatpush1.msra.mxu0 0.0
    %364 = vmatprep.subr.mxu0 0.0
    %365 = vmatpush1.msra.mxu0 0.0
    %366 = vmatprep.mubr.f32.mxu0 0.0
    %367 = vmatmul.mubr.f32.gmra.mrb[0].mxu0 %v229
    %v368 = vpop.f32.mrb[0].mxu0
    %v369 = vadd.f32 0.0, %v368
    %v370 = vpop.f32.mrb[0].mxu0
    %371 = vdwg.mxu0
    %v373 = vrot.slane %v369, 2
    %v375 = vadd.f32 %v217, %v373
    %v376 = vxor.u32 %v301, 2147483648
    %v377 = vmul.f32 %v376, 1.442695
    %v378 = vpow.pop %v377
    %v379 = vadd.f32 %v378, 1.0
    %v380 = vrcp.pop %v379
    %v381 = vmul.f32 1.0, %v380
    %v382 = vtanh.pop %v301
    %v383 = vxor.u32 %v375, 2147483648
    %v384 = vmul.f32 %v383, 1.442695
    %v385 = vpow.pop %v384
    %v386 = vadd.f32 %v385, 1.0
    %v387 = vrcp.pop %v386
    %v388 = vmul.f32 1.0, %v387
    %v389 = vtanh.pop %v375
    %v390 = vmul.f32 %v381, 0.0
    %392 = vrot.lane.b32.xlu0 %v382, 32
    %v393 = vpop.permute.xlu0 %392
    %v395 = vmul.f32 %v381, %v393
    %397 = vrot.lane.b32.xlu0 %v395, 32
    %v398 = vpop.permute.xlu0 %397
    %v400 = vadd.f32 %v390, %v398
    %v401 = vtanh.pop %v400
    %403 = vrot.lane.b32.xlu0 %v401, 32
    %v404 = vpop.permute.xlu0 %403
    %v406 = vmul.f32 %v381, %v404
    %v407 = vmul.f32 %v388, 0.0
    %409 = vrot.lane.b32.xlu0 %v389, 32
    %v410 = vpop.permute.xlu0 %409
    %v412 = vmul.f32 %v388, %v410
    %414 = vrot.lane.b32.xlu0 %v412, 32
    %v415 = vpop.permute.xlu0 %414
    %v417 = vadd.f32 %v407, %v415
    %v418 = vtanh.pop %v417
    %420 = vrot.lane.b32.xlu0 %v418, 32
    %v421 = vpop.permute.xlu0 %420
    %v423 = vmul.f32 %v388, %v421
    %425 = vrot.lane.b32.xlu0 %v406, 64
    %v426 = vpop.permute.xlu0 %425
    %vm428 = vcmask 254976
    %429 = vst.msk [vmem:[#allocation2] sm:$0x3] %vm428, %v426
    %431 = vrot.lane.b32.xlu0 %v423, 64
    %v432 = vpop.permute.xlu0 %431
    %vm434 = vcmask 261126
    %435 = vst.msk [vmem:[#allocation3 + $0x8] sm:$0xc0] %vm434, %v432
    %v436 = vsel %vm52, %v426, 0
    %438 = vmatprep.subr.mxu0 0.0
    %439 = vmatpush1.msra.mxu0 %v220
    %440 = vmatprep.subr.mxu0 0.0
    %441 = vmatpush1.msra.mxu0 %v221
    %442 = vmatprep.subr.mxu0 0.0
    %443 = vmatpush1.msra.mxu0 %v222
    %444 = vmatprep.subr.mxu0 0.0
    %445 = vmatpush1.msra.mxu0 %v223
    %446 = vmatprep.subr.mxu0 0.0
    %447 = vmatpush1.msra.mxu0 0.0
    %448 = vmatprep.subr.mxu0 0.0
    %449 = vmatpush1.msra.mxu0 0.0
    %450 = vmatprep.subr.mxu0 0.0
    %451 = vmatpush1.msra.mxu0 0.0
    %452 = vmatprep.subr.mxu0 0.0
    %453 = vmatpush1.msra.mxu0 0.0
    %454 = vmatprep.subr.mxu0 0.0
    %455 = vmatpush1.msra.mxu0 0.0
    %456 = vmatprep.subr.mxu0 0.0
    %457 = vmatpush1.msra.mxu0 0.0
    %458 = vmatprep.subr.mxu0 0.0
    %459 = vmatpush1.msra.mxu0 0.0
    %460 = vmatprep.subr.mxu0 0.0
    %461 = vmatpush1.msra.mxu0 0.0
    %462 = vmatprep.subr.mxu0 0.0
    %463 = vmatpush1.msra.mxu0 0.0
    %464 = vmatprep.subr.mxu0 0.0
    %465 = vmatpush1.msra.mxu0 0.0
    %466 = vmatprep.subr.mxu0 0.0
    %467 = vmatpush1.msra.mxu0 0.0
    %468 = vmatprep.subr.mxu0 0.0
    %469 = vmatpush1.msra.mxu0 0.0
    %470 = vmatprep.subr.mxu0 0.0
    %471 = vmatpush1.msra.mxu0 0.0
    %472 = vmatprep.subr.mxu0 0.0
    %473 = vmatpush1.msra.mxu0 0.0
    %474 = vmatprep.subr.mxu0 0.0
    %475 = vmatpush1.msra.mxu0 0.0
    %476 = vmatprep.subr.mxu0 0.0
    %477 = vmatpush1.msra.mxu0 0.0
    %478 = vmatprep.subr.mxu0 0.0
    %479 = vmatpush1.msra.mxu0 0.0
    %480 = vmatprep.subr.mxu0 0.0
    %481 = vmatpush1.msra.mxu0 0.0
    %482 = vmatprep.subr.mxu0 0.0
    %483 = vmatpush1.msra.mxu0 0.0
    %484 = vmatprep.subr.mxu0 0.0
    %485 = vmatpush1.msra.mxu0 0.0
    %486 = vmatprep.subr.mxu0 0.0
    %487 = vmatpush1.msra.mxu0 0.0
    %488 = vmatprep.subr.mxu0 0.0
    %489 = vmatpush1.msra.mxu0 0.0
    %490 = vmatprep.subr.mxu0 0.0
    %491 = vmatpush1.msra.mxu0 0.0
    %492 = vmatprep.subr.mxu0 0.0
    %493 = vmatpush1.msra.mxu0 0.0
    %494 = vmatprep.subr.mxu0 0.0
    %495 = vmatpush1.msra.mxu0 0.0
    %496 = vmatprep.subr.mxu0 0.0
    %497 = vmatpush1.msra.mxu0 0.0
    %498 = vmatprep.subr.mxu0 0.0
    %499 = vmatpush1.msra.mxu0 0.0
    %500 = vmatprep.subr.mxu0 0.0
    %501 = vmatpush1.msra.mxu0 0.0
    %502 = vmatprep.mubr.f32.mxu0 0.0
    %503 = vmatmul.mubr.f32.gmra.mrb[0].mxu0 %v436
    %v504 = vpop.f32.mrb[0].mxu0
    %v505 = vadd.f32 0.0, %v504
    %v506 = vpop.f32.mrb[0].mxu0
    %507 = vdwg.mxu0
    %v509 = vrot.slane %v505, 6
    %v511 = vadd.f32 %v126, %v509
    %v512 = vrot.slane %v423, 6
    %513 = vrot.lane.b32.xlu0 %v512, 64
    %v514 = vpop.permute.xlu0 %513
    %v515 = vsel %vm52, %v514, 0
    %517 = vmatprep.subr.mxu0 0.0
    %518 = vmatpush1.msra.mxu0 %v224
    %519 = vmatprep.subr.mxu0 0.0
    %520 = vmatpush1.msra.mxu0 %v225
    %521 = vmatprep.subr.mxu0 0.0
    %522 = vmatpush1.msra.mxu0 %v226
    %523 = vmatprep.subr.mxu0 0.0
    %524 = vmatpush1.msra.mxu0 %v227
    %525 = vmatprep.subr.mxu0 0.0
    %526 = vmatpush1.msra.mxu0 0.0
    %527 = vmatprep.subr.mxu0 0.0
    %528 = vmatpush1.msra.mxu0 0.0
    %529 = vmatprep.subr.mxu0 0.0
    %530 = vmatpush1.msra.mxu0 0.0
    %531 = vmatprep.subr.mxu0 0.0
    %532 = vmatpush1.msra.mxu0 0.0
    %533 = vmatprep.subr.mxu0 0.0
    %534 = vmatpush1.msra.mxu0 0.0
    %535 = vmatprep.subr.mxu0 0.0
    %536 = vmatpush1.msra.mxu0 0.0
    %537 = vmatprep.subr.mxu0 0.0
    %538 = vmatpush1.msra.mxu0 0.0
    %539 = vmatprep.subr.mxu0 0.0
    %540 = vmatpush1.msra.mxu0 0.0
    %541 = vmatprep.subr.mxu0 0.0
    %542 = vmatpush1.msra.mxu0 0.0
    %543 = vmatprep.subr.mxu0 0.0
    %544 = vmatpush1.msra.mxu0 0.0
    %545 = vmatprep.subr.mxu0 0.0
    %546 = vmatpush1.msra.mxu0 0.0
    %547 = vmatprep.subr.mxu0 0.0
    %548 = vmatpush1.msra.mxu0 0.0
    %549 = vmatprep.subr.mxu0 0.0
    %550 = vmatpush1.msra.mxu0 0.0
    %551 = vmatprep.subr.mxu0 0.0
    %552 = vmatpush1.msra.mxu0 0.0
    %553 = vmatprep.subr.mxu0 0.0
    %554 = vmatpush1.msra.mxu0 0.0
    %555 = vmatprep.subr.mxu0 0.0
    %556 = vmatpush1.msra.mxu0 0.0
    %557 = vmatprep.subr.mxu0 0.0
    %558 = vmatpush1.msra.mxu0 0.0
    %559 = vmatprep.subr.mxu0 0.0
    %560 = vmatpush1.msra.mxu0 0.0
    %561 = vmatprep.subr.mxu0 0.0
    %562 = vmatpush1.msra.mxu0 0.0
    %563 = vmatprep.subr.mxu0 0.0
    %564 = vmatpush1.msra.mxu0 0.0
    %565 = vmatprep.subr.mxu0 0.0
    %566 = vmatpush1.msra.mxu0 0.0
    %567 = vmatprep.subr.mxu0 0.0
    %568 = vmatpush1.msra.mxu0 0.0
    %569 = vmatprep.subr.mxu0 0.0
    %570 = vmatpush1.msra.mxu0 0.0
    %571 = vmatprep.subr.mxu0 0.0
    %572 = vmatpush1.msra.mxu0 0.0
    %573 = vmatprep.subr.mxu0 0.0
    %574 = vmatpush1.msra.mxu0 0.0
    %575 = vmatprep.subr.mxu0 0.0
    %576 = vmatpush1.msra.mxu0 0.0
    %577 = vmatprep.subr.mxu0 0.0
    %578 = vmatpush1.msra.mxu0 0.0
    %579 = vmatprep.subr.mxu0 0.0
    %580 = vmatpush1.msra.mxu0 0.0
    %581 = vmatprep.mubr.f32.mxu0 0.0
    %582 = vmatmul.mubr.f32.gmra.mrb[0].mxu0 %v515
    %v583 = vpop.f32.mrb[0].mxu0
    %v584 = vadd.f32 0.0, %v583
    %v585 = vpop.f32.mrb[0].mxu0
    %586 = vdwg.mxu0
    %v588 = vrot.slane %v584, 4
    %v590 = vadd.f32 %v217, %v588
    %v591 = vxor.u32 %v511, 2147483648
    %v592 = vmul.f32 %v591, 1.442695
    %v593 = vpow.pop %v592
    %v594 = vadd.f32 %v593, 1.0
    %v595 = vrcp.pop %v594
    %v596 = vmul.f32 1.0, %v595
    %v597 = vtanh.pop %v511
    %v598 = vxor.u32 %v590, 2147483648
    %v599 = vmul.f32 %v598, 1.442695
    %v600 = vpow.pop %v599
    %v601 = vadd.f32 %v600, 1.0
    %v602 = vrcp.pop %v601
    %v603 = vmul.f32 1.0, %v602
    %v604 = vtanh.pop %v590
    %v606 = vrot.slane %v400, 6
    %v608 = vmul.f32 %v596, %v606
    %610 = vrot.lane.b32.xlu0 %v597, 32
    %v611 = vpop.permute.xlu0 %610
    %v613 = vmul.f32 %v596, %v611
    %615 = vrot.lane.b32.xlu0 %v613, 32
    %v616 = vpop.permute.xlu0 %615
    %v618 = vadd.f32 %v608, %v616
    %v619 = vtanh.pop %v618
    %621 = vrot.lane.b32.xlu0 %v619, 32
    %v622 = vpop.permute.xlu0 %621
    %v624 = vmul.f32 %v596, %v622
    %v626 = vrot.slane %v417, 2
    %v628 = vmul.f32 %v603, %v626
    %630 = vrot.lane.b32.xlu0 %v604, 32
    %v631 = vpop.permute.xlu0 %630
    %v633 = vmul.f32 %v603, %v631
    %635 = vrot.lane.b32.xlu0 %v633, 32
    %v636 = vpop.permute.xlu0 %635
    %v638 = vadd.f32 %v628, %v636
    %v639 = vtanh.pop %v638
    %641 = vrot.lane.b32.xlu0 %v639, 32
    %v642 = vpop.permute.xlu0 %641
    %v644 = vmul.f32 %v603, %v642
    %646 = vrot.lane.b32.xlu0 %v624, 64
    %v647 = vpop.permute.xlu0 %646
    %vm649 = vcmask 257026
    %650 = vst.msk [vmem:[#allocation2] sm:$0xc] %vm649, %v647
    %652 = vrot.lane.b32.xlu0 %v644, 64
    %v653 = vpop.permute.xlu0 %652
    %vm655 = vcmask 259076
    %656 = vst.msk [vmem:[#allocation3 + $0x8] sm:$0x30] %vm655, %v653
    %v657 = vrot.slane %v624, 2
    %658 = vrot.lane.b32.xlu0 %v657, 64
    %v659 = vpop.permute.xlu0 %658
    %v660 = vsel %vm52, %v659, 0
    %662 = vmatprep.subr.mxu0 0.0
    %663 = vmatpush1.msra.mxu0 %v220
    %664 = vmatprep.subr.mxu0 0.0
    %665 = vmatpush1.msra.mxu0 %v221
    %666 = vmatprep.subr.mxu0 0.0
    %667 = vmatpush1.msra.mxu0 %v222
    %668 = vmatprep.subr.mxu0 0.0
    %669 = vmatpush1.msra.mxu0 %v223
    %670 = vmatprep.subr.mxu0 0.0
    %671 = vmatpush1.msra.mxu0 0.0
    %672 = vmatprep.subr.mxu0 0.0
    %673 = vmatpush1.msra.mxu0 0.0
    %674 = vmatprep.subr.mxu0 0.0
    %675 = vmatpush1.msra.mxu0 0.0
    %676 = vmatprep.subr.mxu0 0.0
    %677 = vmatpush1.msra.mxu0 0.0
    %678 = vmatprep.subr.mxu0 0.0
    %679 = vmatpush1.msra.mxu0 0.0
    %680 = vmatprep.subr.mxu0 0.0
    %681 = vmatpush1.msra.mxu0 0.0
    %682 = vmatprep.subr.mxu0 0.0
    %683 = vmatpush1.msra.mxu0 0.0
    %684 = vmatprep.subr.mxu0 0.0
    %685 = vmatpush1.msra.mxu0 0.0
    %686 = vmatprep.subr.mxu0 0.0
    %687 = vmatpush1.msra.mxu0 0.0
    %688 = vmatprep.subr.mxu0 0.0
    %689 = vmatpush1.msra.mxu0 0.0
    %690 = vmatprep.subr.mxu0 0.0
    %691 = vmatpush1.msra.mxu0 0.0
    %692 = vmatprep.subr.mxu0 0.0
    %693 = vmatpush1.msra.mxu0 0.0
    %694 = vmatprep.subr.mxu0 0.0
    %695 = vmatpush1.msra.mxu0 0.0
    %696 = vmatprep.subr.mxu0 0.0
    %697 = vmatpush1.msra.mxu0 0.0
    %698 = vmatprep.subr.mxu0 0.0
    %699 = vmatpush1.msra.mxu0 0.0
    %700 = vmatprep.subr.mxu0 0.0
    %701 = vmatpush1.msra.mxu0 0.0
    %702 = vmatprep.subr.mxu0 0.0
    %703 = vmatpush1.msra.mxu0 0.0
    %704 = vmatprep.subr.mxu0 0.0
    %705 = vmatpush1.msra.mxu0 0.0
    %706 = vmatprep.subr.mxu0 0.0
    %707 = vmatpush1.msra.mxu0 0.0
    %708 = vmatprep.subr.mxu0 0.0
    %709 = vmatpush1.msra.mxu0 0.0
    %710 = vmatprep.subr.mxu0 0.0
    %711 = vmatpush1.msra.mxu0 0.0
    %712 = vmatprep.subr.mxu0 0.0
    %713 = vmatpush1.msra.mxu0 0.0
    %714 = vmatprep.subr.mxu0 0.0
    %715 = vmatpush1.msra.mxu0 0.0
    %716 = vmatprep.subr.mxu0 0.0
    %717 = vmatpush1.msra.mxu0 0.0
    %718 = vmatprep.subr.mxu0 0.0
    %719 = vmatpush1.msra.mxu0 0.0
    %720 = vmatprep.subr.mxu0 0.0
    %721 = vmatpush1.msra.mxu0 0.0
    %722 = vmatprep.subr.mxu0 0.0
    %723 = vmatpush1.msra.mxu0 0.0
    %724 = vmatprep.subr.mxu0 0.0
    %725 = vmatpush1.msra.mxu0 0.0
    %726 = vmatprep.mubr.f32.mxu0 0.0
    %727 = vmatmul.mubr.f32.gmra.mrb[0].mxu0 %v660
    %v728 = vpop.f32.mrb[0].mxu0
    %v729 = vadd.f32 0.0, %v728
    %v730 = vpop.f32.mrb[0].mxu0
    %731 = vdwg.mxu0
    %v733 = vrot.slane %v729, 4
    %v735 = vadd.f32 %v126, %v733
    %v736 = vrot.slane %v644, 4
    %737 = vrot.lane.b32.xlu0 %v736, 64
    %v738 = vpop.permute.xlu0 %737
    %v739 = vsel %vm52, %v738, 0
    %741 = vmatprep.subr.mxu0 0.0
    %742 = vmatpush1.msra.mxu0 %v224
    %743 = vmatprep.subr.mxu0 0.0
    %744 = vmatpush1.msra.mxu0 %v225
    %745 = vmatprep.subr.mxu0 0.0
    %746 = vmatpush1.msra.mxu0 %v226
    %747 = vmatprep.subr.mxu0 0.0
    %748 = vmatpush1.msra.mxu0 %v227
    %749 = vmatprep.subr.mxu0 0.0
    %750 = vmatpush1.msra.mxu0 0.0
    %751 = vmatprep.subr.mxu0 0.0
    %752 = vmatpush1.msra.mxu0 0.0
    %753 = vmatprep.subr.mxu0 0.0
    %754 = vmatpush1.msra.mxu0 0.0
    %755 = vmatprep.subr.mxu0 0.0
    %756 = vmatpush1.msra.mxu0 0.0
    %757 = vmatprep.subr.mxu0 0.0
    %758 = vmatpush1.msra.mxu0 0.0
    %759 = vmatprep.subr.mxu0 0.0
    %760 = vmatpush1.msra.mxu0 0.0
    %761 = vmatprep.subr.mxu0 0.0
    %762 = vmatpush1.msra.mxu0 0.0
    %763 = vmatprep.subr.mxu0 0.0
    %764 = vmatpush1.msra.mxu0 0.0
    %765 = vmatprep.subr.mxu0 0.0
    %766 = vmatpush1.msra.mxu0 0.0
    %767 = vmatprep.subr.mxu0 0.0
    %768 = vmatpush1.msra.mxu0 0.0
    %769 = vmatprep.subr.mxu0 0.0
    %770 = vmatpush1.msra.mxu0 0.0
    %771 = vmatprep.subr.mxu0 0.0
    %772 = vmatpush1.msra.mxu0 0.0
    %773 = vmatprep.subr.mxu0 0.0
    %774 = vmatpush1.msra.mxu0 0.0
    %775 = vmatprep.subr.mxu0 0.0
    %776 = vmatpush1.msra.mxu0 0.0
    %777 = vmatprep.subr.mxu0 0.0
    %778 = vmatpush1.msra.mxu0 0.0
    %779 = vmatprep.subr.mxu0 0.0
    %780 = vmatpush1.msra.mxu0 0.0
    %781 = vmatprep.subr.mxu0 0.0
    %782 = vmatpush1.msra.mxu0 0.0
    %783 = vmatprep.subr.mxu0 0.0
    %784 = vmatpush1.msra.mxu0 0.0
    %785 = vmatprep.subr.mxu0 0.0
    %786 = vmatpush1.msra.mxu0 0.0
    %787 = vmatprep.subr.mxu0 0.0
    %788 = vmatpush1.msra.mxu0 0.0
    %789 = vmatprep.subr.mxu0 0.0
    %790 = vmatpush1.msra.mxu0 0.0
    %791 = vmatprep.subr.mxu0 0.0
    %792 = vmatpush1.msra.mxu0 0.0
    %793 = vmatprep.subr.mxu0 0.0
    %794 = vmatpush1.msra.mxu0 0.0
    %795 = vmatprep.subr.mxu0 0.0
    %796 = vmatpush1.msra.mxu0 0.0
    %797 = vmatprep.subr.mxu0 0.0
    %798 = vmatpush1.msra.mxu0 0.0
    %799 = vmatprep.subr.mxu0 0.0
    %800 = vmatpush1.msra.mxu0 0.0
    %801 = vmatprep.subr.mxu0 0.0
    %802 = vmatpush1.msra.mxu0 0.0
    %803 = vmatprep.subr.mxu0 0.0
    %804 = vmatpush1.msra.mxu0 0.0
    %805 = vmatprep.mubr.f32.mxu0 0.0
    %806 = vmatmul.mubr.f32.gmra.mrb[0].mxu0 %v739
    %v807 = vpop.f32.mrb[0].mxu0
    %v808 = vadd.f32 0.0, %v807
    %v809 = vpop.f32.mrb[0].mxu0
    %810 = vdwg.mxu0
    %v812 = vrot.slane %v808, 6
    %v814 = vadd.f32 %v217, %v812
    %v815 = vxor.u32 %v735, 2147483648
    %v816 = vmul.f32 %v815, 1.442695
    %v817 = vpow.pop %v816
    %v818 = vadd.f32 %v817, 1.0
    %v819 = vrcp.pop %v818
    %v820 = vmul.f32 1.0, %v819
    %v821 = vtanh.pop %v735
    %v822 = vxor.u32 %v814, 2147483648
    %v823 = vmul.f32 %v822, 1.442695
    %v824 = vpow.pop %v823
    %v825 = vadd.f32 %v824, 1.0
    %v826 = vrcp.pop %v825
    %v827 = vmul.f32 1.0, %v826
    %v828 = vtanh.pop %v814
    %v830 = vrot.slane %v618, 6
    %v832 = vmul.f32 %v820, %v830
    %834 = vrot.lane.b32.xlu0 %v821, 32
    %v835 = vpop.permute.xlu0 %834
    %v837 = vmul.f32 %v820, %v835
    %839 = vrot.lane.b32.xlu0 %v837, 32
    %v840 = vpop.permute.xlu0 %839
    %v842 = vadd.f32 %v832, %v840
    %v843 = vtanh.pop %v842
    %845 = vrot.lane.b32.xlu0 %v843, 32
    %v846 = vpop.permute.xlu0 %845
    %v848 = vmul.f32 %v820, %v846
    %v850 = vrot.slane %v638, 2
    %v852 = vmul.f32 %v827, %v850
    %854 = vrot.lane.b32.xlu0 %v828, 32
    %v855 = vpop.permute.xlu0 %854
    %v857 = vmul.f32 %v827, %v855
    %859 = vrot.lane.b32.xlu0 %v857, 32
    %v860 = vpop.permute.xlu0 %859
    %v862 = vadd.f32 %v852, %v860
    %v863 = vtanh.pop %v862
    %865 = vrot.lane.b32.xlu0 %v863, 32
    %v866 = vpop.permute.xlu0 %865
    %v868 = vmul.f32 %v827, %v866
    %870 = vrot.lane.b32.xlu0 %v848, 64
    %v871 = vpop.permute.xlu0 %870
    %873 = vst.msk [vmem:[#allocation2] sm:$0x30] %vm655, %v871
    %875 = vrot.lane.b32.xlu0 %v868, 64
    %v876 = vpop.permute.xlu0 %875
    %878 = vst.msk [vmem:[#allocation3 + $0x8] sm:$0xc] %vm649, %v876
    %v879 = vrot.slane %v848, 4
    %880 = vrot.lane.b32.xlu0 %v879, 64
    %v881 = vpop.permute.xlu0 %880
    %v882 = vsel %vm52, %v881, 0
    %884 = vmatprep.subr.mxu0 0.0
    %885 = vmatpush1.msra.mxu0 %v220
    %886 = vmatprep.subr.mxu0 0.0
    %887 = vmatpush1.msra.mxu0 %v221
    %888 = vmatprep.subr.mxu0 0.0
    %889 = vmatpush1.msra.mxu0 %v222
    %890 = vmatprep.subr.mxu0 0.0
    %891 = vmatpush1.msra.mxu0 %v223
    %892 = vmatprep.subr.mxu0 0.0
    %893 = vmatpush1.msra.mxu0 0.0
    %894 = vmatprep.subr.mxu0 0.0
    %895 = vmatpush1.msra.mxu0 0.0
    %896 = vmatprep.subr.mxu0 0.0
    %897 = vmatpush1.msra.mxu0 0.0
    %898 = vmatprep.subr.mxu0 0.0
    %899 = vmatpush1.msra.mxu0 0.0
    %900 = vmatprep.subr.mxu0 0.0
    %901 = vmatpush1.msra.mxu0 0.0
    %902 = vmatprep.subr.mxu0 0.0
    %903 = vmatpush1.msra.mxu0 0.0
    %904 = vmatprep.subr.mxu0 0.0
    %905 = vmatpush1.msra.mxu0 0.0
    %906 = vmatprep.subr.mxu0 0.0
    %907 = vmatpush1.msra.mxu0 0.0
    %908 = vmatprep.subr.mxu0 0.0
    %909 = vmatpush1.msra.mxu0 0.0
    %910 = vmatprep.subr.mxu0 0.0
    %911 = vmatpush1.msra.mxu0 0.0
    %912 = vmatprep.subr.mxu0 0.0
    %913 = vmatpush1.msra.mxu0 0.0
    %914 = vmatprep.subr.mxu0 0.0
    %915 = vmatpush1.msra.mxu0 0.0
    %916 = vmatprep.subr.mxu0 0.0
    %917 = vmatpush1.msra.mxu0 0.0
    %918 = vmatprep.subr.mxu0 0.0
    %919 = vmatpush1.msra.mxu0 0.0
    %920 = vmatprep.subr.mxu0 0.0
    %921 = vmatpush1.msra.mxu0 0.0
    %922 = vmatprep.subr.mxu0 0.0
    %923 = vmatpush1.msra.mxu0 0.0
    %924 = vmatprep.subr.mxu0 0.0
    %925 = vmatpush1.msra.mxu0 0.0
    %926 = vmatprep.subr.mxu0 0.0
    %927 = vmatpush1.msra.mxu0 0.0
    %928 = vmatprep.subr.mxu0 0.0
    %929 = vmatpush1.msra.mxu0 0.0
    %930 = vmatprep.subr.mxu0 0.0
    %931 = vmatpush1.msra.mxu0 0.0
    %932 = vmatprep.subr.mxu0 0.0
    %933 = vmatpush1.msra.mxu0 0.0
    %934 = vmatprep.subr.mxu0 0.0
    %935 = vmatpush1.msra.mxu0 0.0
    %936 = vmatprep.subr.mxu0 0.0
    %937 = vmatpush1.msra.mxu0 0.0
    %938 = vmatprep.subr.mxu0 0.0
    %939 = vmatpush1.msra.mxu0 0.0
    %940 = vmatprep.subr.mxu0 0.0
    %941 = vmatpush1.msra.mxu0 0.0
    %942 = vmatprep.subr.mxu0 0.0
    %943 = vmatpush1.msra.mxu0 0.0
    %944 = vmatprep.subr.mxu0 0.0
    %945 = vmatpush1.msra.mxu0 0.0
    %946 = vmatprep.subr.mxu0 0.0
    %947 = vmatpush1.msra.mxu0 0.0
    %948 = vmatprep.mubr.f32.mxu0 0.0
    %949 = vmatmul.mubr.f32.gmra.mrb[0].mxu0 %v882
    %v950 = vpop.f32.mrb[0].mxu0
    %v951 = vadd.f32 0.0, %v950
    %v952 = vpop.f32.mrb[0].mxu0
    %953 = vdwg.mxu0
    %v955 = vrot.slane %v951, 2
    %v957 = vadd.f32 %v126, %v955
    %v958 = vrot.slane %v868, 2
    %959 = vrot.lane.b32.xlu0 %v958, 64
    %v960 = vpop.permute.xlu0 %959
    %v961 = vsel %vm52, %v960, 0
    %963 = vmatprep.subr.mxu0 0.0
    %964 = vmatpush1.msra.mxu0 %v224
    %965 = vmatprep.subr.mxu0 0.0
    %966 = vmatpush1.msra.mxu0 %v225
    %967 = vmatprep.subr.mxu0 0.0
    %968 = vmatpush1.msra.mxu0 %v226
    %969 = vmatprep.subr.mxu0 0.0
    %970 = vmatpush1.msra.mxu0 %v227
    %971 = vmatprep.subr.mxu0 0.0
    %972 = vmatpush1.msra.mxu0 0.0
    %973 = vmatprep.subr.mxu0 0.0
    %974 = vmatpush1.msra.mxu0 0.0
    %975 = vmatprep.subr.mxu0 0.0
    %976 = vmatpush1.msra.mxu0 0.0
    %977 = vmatprep.subr.mxu0 0.0
    %978 = vmatpush1.msra.mxu0 0.0
    %979 = vmatprep.subr.mxu0 0.0
    %980 = vmatpush1.msra.mxu0 0.0
    %981 = vmatprep.subr.mxu0 0.0
    %982 = vmatpush1.msra.mxu0 0.0
    %983 = vmatprep.subr.mxu0 0.0
    %984 = vmatpush1.msra.mxu0 0.0
    %985 = vmatprep.subr.mxu0 0.0
    %986 = vmatpush1.msra.mxu0 0.0
    %987 = vmatprep.subr.mxu0 0.0
    %988 = vmatpush1.msra.mxu0 0.0
    %989 = vmatprep.subr.mxu0 0.0
    %990 = vmatpush1.msra.mxu0 0.0
    %991 = vmatprep.subr.mxu0 0.0
    %992 = vmatpush1.msra.mxu0 0.0
    %993 = vmatprep.subr.mxu0 0.0
    %994 = vmatpush1.msra.mxu0 0.0
    %995 = vmatprep.subr.mxu0 0.0
    %996 = vmatpush1.msra.mxu0 0.0
    %997 = vmatprep.subr.mxu0 0.0
    %998 = vmatpush1.msra.mxu0 0.0
    %999 = vmatprep.subr.mxu0 0.0
    %1000 = vmatpush1.msra.mxu0 0.0
    %1001 = vmatprep.subr.mxu0 0.0
    %1002 = vmatpush1.msra.mxu0 0.0
    %1003 = vmatprep.subr.mxu0 0.0
    %1004 = vmatpush1.msra.mxu0 0.0
    %1005 = vmatprep.subr.mxu0 0.0
    %1006 = vmatpush1.msra.mxu0 0.0
    %1007 = vmatprep.subr.mxu0 0.0
    %1008 = vmatpush1.msra.mxu0 0.0
    %1009 = vmatprep.subr.mxu0 0.0
    %1010 = vmatpush1.msra.mxu0 0.0
    %1011 = vmatprep.subr.mxu0 0.0
    %1012 = vmatpush1.msra.mxu0 0.0
    %1013 = vmatprep.subr.mxu0 0.0
    %1014 = vmatpush1.msra.mxu0 0.0
    %1015 = vmatprep.subr.mxu0 0.0
    %1016 = vmatpush1.msra.mxu0 0.0
    %1017 = vmatprep.subr.mxu0 0.0
    %1018 = vmatpush1.msra.mxu0 0.0
    %1019 = vmatprep.subr.mxu0 0.0
    %1020 = vmatpush1.msra.mxu0 0.0
    %1021 = vmatprep.subr.mxu0 0.0
    %1022 = vmatpush1.msra.mxu0 0.0
    %1023 = vmatprep.subr.mxu0 0.0
    %1024 = vmatpush1.msra.mxu0 0.0
    %1025 = vmatprep.subr.mxu0 0.0
    %1026 = vmatpush1.msra.mxu0 0.0
    %1027 = vmatprep.mubr.f32.mxu0 0.0
    %1028 = vmatmul.mubr.f32.gmra.mrb[0].mxu0 %v961
    %v1029 = vpop.f32.mrb[0].mxu0
    %v1030 = vadd.f32 0.0, %v1029
    %v1031 = vpop.f32.mrb[0].mxu0
    %1032 = vdwg.mxu0
    %v1033 = vadd.f32 %v217, %v1030
    %v1034 = vxor.u32 %v957, 2147483648
    %v1035 = vmul.f32 %v1034, 1.442695
    %v1036 = vpow.pop %v1035
    %v1037 = vadd.f32 %v1036, 1.0
    %v1038 = vrcp.pop %v1037
    %v1039 = vmul.f32 1.0, %v1038
    %v1040 = vtanh.pop %v957
    %v1041 = vxor.u32 %v1033, 2147483648
    %v1042 = vmul.f32 %v1041, 1.442695
    %v1043 = vpow.pop %v1042
    %v1044 = vadd.f32 %v1043, 1.0
    %v1045 = vrcp.pop %v1044
    %v1046 = vmul.f32 1.0, %v1045
    %v1047 = vtanh.pop %v1033
    %v1049 = vrot.slane %v842, 6
    %v1051 = vmul.f32 %v1039, %v1049
    %1053 = vrot.lane.b32.xlu0 %v1040, 32
    %v1054 = vpop.permute.xlu0 %1053
    %v1056 = vmul.f32 %v1039, %v1054
    %1058 = vrot.lane.b32.xlu0 %v1056, 32
    %v1059 = vpop.permute.xlu0 %1058
    %v1061 = vadd.f32 %v1051, %v1059
    %v1062 = vtanh.pop %v1061
    %1064 = vrot.lane.b32.xlu0 %v1062, 32
    %v1065 = vpop.permute.xlu0 %1064
    %v1067 = vmul.f32 %v1039, %v1065
    %v1069 = vrot.slane %v862, 2
    %v1071 = vmul.f32 %v1046, %v1069
    %1073 = vrot.lane.b32.xlu0 %v1047, 32
    %v1074 = vpop.permute.xlu0 %1073
    %v1076 = vmul.f32 %v1046, %v1074
    %1078 = vrot.lane.b32.xlu0 %v1076, 32
    %v1079 = vpop.permute.xlu0 %1078
    %v1081 = vadd.f32 %v1071, %v1079
    %v1082 = vtanh.pop %v1081
    %1084 = vrot.lane.b32.xlu0 %v1082, 32
    %v1085 = vpop.permute.xlu0 %1084
    %v1087 = vmul.f32 %v1046, %v1085
    %1089 = vrot.lane.b32.xlu0 %v1067, 64
    %v1090 = vpop.permute.xlu0 %1089
    %1092 = vst.msk [vmem:[#allocation2] sm:$0xc0] %vm434, %v1090
    %1094 = vrot.lane.b32.xlu0 %v1087, 64
    %v1095 = vpop.permute.xlu0 %1094
    %1097 = vst.msk [vmem:[#allocation3 + $0x8] sm:$0x3] %vm428, %v1095
    %v1098 = vrot.slane %v1067, 6
    %1099 = vrot.lane.b32.xlu0 %v1098, 64
    %v1100 = vpop.permute.xlu0 %1099
    %v1101 = vsel %vm52, %v1100, 0
    %1103 = vmatprep.subr.mxu0 0.0
    %1104 = vmatpush1.msra.mxu0 %v220
    %1105 = vmatprep.subr.mxu0 0.0
    %1106 = vmatpush1.msra.mxu0 %v221
    %1107 = vmatprep.subr.mxu0 0.0
    %1108 = vmatpush1.msra.mxu0 %v222
    %1109 = vmatprep.subr.mxu0 0.0
    %1110 = vmatpush1.msra.mxu0 %v223
    %1111 = vmatprep.subr.mxu0 0.0
    %1112 = vmatpush1.msra.mxu0 0.0
    %1113 = vmatprep.subr.mxu0 0.0
    %1114 = vmatpush1.msra.mxu0 0.0
    %1115 = vmatprep.subr.mxu0 0.0
    %1116 = vmatpush1.msra.mxu0 0.0
    %1117 = vmatprep.subr.mxu0 0.0
    %1118 = vmatpush1.msra.mxu0 0.0
    %1119 = vmatprep.subr.mxu0 0.0
    %1120 = vmatpush1.msra.mxu0 0.0
    %1121 = vmatprep.subr.mxu0 0.0
    %1122 = vmatpush1.msra.mxu0 0.0
    %1123 = vmatprep.subr.mxu0 0.0
    %1124 = vmatpush1.msra.mxu0 0.0
    %1125 = vmatprep.subr.mxu0 0.0
    %1126 = vmatpush1.msra.mxu0 0.0
    %1127 = vmatprep.subr.mxu0 0.0
    %1128 = vmatpush1.msra.mxu0 0.0
    %1129 = vmatprep.subr.mxu0 0.0
    %1130 = vmatpush1.msra.mxu0 0.0
    %1131 = vmatprep.subr.mxu0 0.0
    %1132 = vmatpush1.msra.mxu0 0.0
    %1133 = vmatprep.subr.mxu0 0.0
    %1134 = vmatpush1.msra.mxu0 0.0
    %1135 = vmatprep.subr.mxu0 0.0
    %1136 = vmatpush1.msra.mxu0 0.0
    %1137 = vmatprep.subr.mxu0 0.0
    %1138 = vmatpush1.msra.mxu0 0.0
    %1139 = vmatprep.subr.mxu0 0.0
    %1140 = vmatpush1.msra.mxu0 0.0
    %1141 = vmatprep.subr.mxu0 0.0
    %1142 = vmatpush1.msra.mxu0 0.0
    %1143 = vmatprep.subr.mxu0 0.0
    %1144 = vmatpush1.msra.mxu0 0.0
    %1145 = vmatprep.subr.mxu0 0.0
    %1146 = vmatpush1.msra.mxu0 0.0
    %1147 = vmatprep.subr.mxu0 0.0
    %1148 = vmatpush1.msra.mxu0 0.0
    %1149 = vmatprep.subr.mxu0 0.0
    %1150 = vmatpush1.msra.mxu0 0.0
    %1151 = vmatprep.subr.mxu0 0.0
    %1152 = vmatpush1.msra.mxu0 0.0
    %1153 = vmatprep.subr.mxu0 0.0
    %1154 = vmatpush1.msra.mxu0 0.0
    %1155 = vmatprep.subr.mxu0 0.0
    %1156 = vmatpush1.msra.mxu0 0.0
    %1157 = vmatprep.subr.mxu0 0.0
    %1158 = vmatpush1.msra.mxu0 0.0
    %1159 = vmatprep.subr.mxu0 0.0
    %1160 = vmatpush1.msra.mxu0 0.0
    %1161 = vmatprep.subr.mxu0 0.0
    %1162 = vmatpush1.msra.mxu0 0.0
    %1163 = vmatprep.subr.mxu0 0.0
    %1164 = vmatpush1.msra.mxu0 0.0
    %1165 = vmatprep.subr.mxu0 0.0
    %1166 = vmatpush1.msra.mxu0 0.0
    %1167 = vmatprep.mubr.f32.mxu0 0.0
    %1168 = vmatmul.mubr.f32.gmra.mrb[0].mxu0 %v1101
    %v1169 = vpop.f32.mrb[0].mxu0
    %v1170 = vadd.f32 0.0, %v1169
    %v1171 = vpop.f32.mrb[0].mxu0
    %1172 = vdwg.mxu0
    %v1173 = vadd.f32 %v131, %v1170
    %v1174 = vsel %vm52, %v1095, 0
    %1176 = vmatprep.subr.mxu0 0.0
    %1177 = vmatpush1.msra.mxu0 %v224
    %1178 = vmatprep.subr.mxu0 0.0
    %1179 = vmatpush1.msra.mxu0 %v225
    %1180 = vmatprep.subr.mxu0 0.0
    %1181 = vmatpush1.msra.mxu0 %v226
    %1182 = vmatprep.subr.mxu0 0.0
    %1183 = vmatpush1.msra.mxu0 %v227
    %1184 = vmatprep.subr.mxu0 0.0
    %1185 = vmatpush1.msra.mxu0 0.0
    %1186 = vmatprep.subr.mxu0 0.0
    %1187 = vmatpush1.msra.mxu0 0.0
    %1188 = vmatprep.subr.mxu0 0.0
    %1189 = vmatpush1.msra.mxu0 0.0
    %1190 = vmatprep.subr.mxu0 0.0
    %1191 = vmatpush1.msra.mxu0 0.0
    %1192 = vmatprep.subr.mxu0 0.0
    %1193 = vmatpush1.msra.mxu0 0.0
    %1194 = vmatprep.subr.mxu0 0.0
    %1195 = vmatpush1.msra.mxu0 0.0
    %1196 = vmatprep.subr.mxu0 0.0
    %1197 = vmatpush1.msra.mxu0 0.0
    %1198 = vmatprep.subr.mxu0 0.0
    %1199 = vmatpush1.msra.mxu0 0.0
    %1200 = vmatprep.subr.mxu0 0.0
    %1201 = vmatpush1.msra.mxu0 0.0
    %1202 = vmatprep.subr.mxu0 0.0
    %1203 = vmatpush1.msra.mxu0 0.0
    %1204 = vmatprep.subr.mxu0 0.0
    %1205 = vmatpush1.msra.mxu0 0.0
    %1206 = vmatprep.subr.mxu0 0.0
    %1207 = vmatpush1.msra.mxu0 0.0
    %1208 = vmatprep.subr.mxu0 0.0
    %1209 = vmatpush1.msra.mxu0 0.0
    %1210 = vmatprep.subr.mxu0 0.0
    %1211 = vmatpush1.msra.mxu0 0.0
    %1212 = vmatprep.subr.mxu0 0.0
    %1213 = vmatpush1.msra.mxu0 0.0
    %1214 = vmatprep.subr.mxu0 0.0
    %1215 = vmatpush1.msra.mxu0 0.0
    %1216 = vmatprep.subr.mxu0 0.0
    %1217 = vmatpush1.msra.mxu0 0.0
    %1218 = vmatprep.subr.mxu0 0.0
    %1219 = vmatpush1.msra.mxu0 0.0
    %1220 = vmatprep.subr.mxu0 0.0
    %1221 = vmatpush1.msra.mxu0 0.0
    %1222 = vmatprep.subr.mxu0 0.0
    %1223 = vmatpush1.msra.mxu0 0.0
    %1224 = vmatprep.subr.mxu0 0.0
    %1225 = vmatpush1.msra.mxu0 0.0
    %1226 = vmatprep.subr.mxu0 0.0
    %1227 = vmatpush1.msra.mxu0 0.0
    %1228 = vmatprep.subr.mxu0 0.0
    %1229 = vmatpush1.msra.mxu0 0.0
    %1230 = vmatprep.subr.mxu0 0.0
    %1231 = vmatpush1.msra.mxu0 0.0
    %1232 = vmatprep.subr.mxu0 0.0
    %1233 = vmatpush1.msra.mxu0 0.0
    %1234 = vmatprep.subr.mxu0 0.0
    %1235 = vmatpush1.msra.mxu0 0.0
    %1236 = vmatprep.subr.mxu0 0.0
    %1237 = vmatpush1.msra.mxu0 0.0
    %1238 = vmatprep.subr.mxu0 0.0
    %1239 = vmatpush1.msra.mxu0 0.0
    %1240 = vmatprep.mubr.f32.mxu0 0.0
    %1241 = vmatmul.mubr.f32.gmra.mrb[0].mxu0 %v1174
    %v1242 = vpop.f32.mrb[0].mxu0
    %v1243 = vadd.f32 0.0, %v1242
    %v1244 = vpop.f32.mrb[0].mxu0
    %1245 = vdwg.mxu0
    %v1247 = vrot.slane %v1243, 2
    %v1249 = vadd.f32 %v212, %v1247
    %v1250 = vxor.u32 %v1173, 2147483648
    %v1251 = vmul.f32 %v1250, 1.442695
    %v1252 = vpow.pop %v1251
    %v1253 = vadd.f32 %v1252, 1.0
    %v1254 = vrcp.pop %v1253
    %v1255 = vmul.f32 1.0, %v1254
    %v1256 = vtanh.pop %v1173
    %v1257 = vxor.u32 %v1249, 2147483648
    %v1258 = vmul.f32 %v1257, 1.442695
    %v1259 = vpow.pop %v1258
    %v1260 = vadd.f32 %v1259, 1.0
    %v1261 = vrcp.pop %v1260
    %v1262 = vmul.f32 1.0, %v1261
    %v1263 = vtanh.pop %v1249
    %v1265 = vrot.slane %v1061, 6
    %v1267 = vmul.f32 %v1255, %v1265
    %1269 = vrot.lane.b32.xlu0 %v1256, 32
    %v1270 = vpop.permute.xlu0 %1269
    %v1272 = vmul.f32 %v1255, %v1270
    %1274 = vrot.lane.b32.xlu0 %v1272, 32
    %v1275 = vpop.permute.xlu0 %1274
    %v1277 = vadd.f32 %v1267, %v1275
    %v1278 = vtanh.pop %v1277
    %1280 = vrot.lane.b32.xlu0 %v1278, 32
    %v1281 = vpop.permute.xlu0 %1280
    %v1283 = vmul.f32 %v1255, %v1281
    %v1285 = vrot.slane %v1081, 2
    %v1287 = vmul.f32 %v1262, %v1285
    %1289 = vrot.lane.b32.xlu0 %v1263, 32
    %v1290 = vpop.permute.xlu0 %1289
    %v1292 = vmul.f32 %v1262, %v1290
    %1294 = vrot.lane.b32.xlu0 %v1292, 32
    %v1295 = vpop.permute.xlu0 %1294
    %v1297 = vadd.f32 %v1287, %v1295
    %v1298 = vtanh.pop %v1297
    %1300 = vrot.lane.b32.xlu0 %v1298, 32
    %v1301 = vpop.permute.xlu0 %1300
    %v1303 = vmul.f32 %v1262, %v1301
    %1305 = vrot.lane.b32.xlu0 %v1283, 64
    %v1306 = vpop.permute.xlu0 %1305
    %1308 = vst.msk [vmem:[#allocation2 + $0x8] sm:$0x3] %vm428, %v1306
    %1310 = vrot.lane.b32.xlu0 %v1303, 64
    %v1311 = vpop.permute.xlu0 %1310
    %1313 = vst.msk [vmem:[#allocation3] sm:$0xc0] %vm434, %v1311
    %v1314 = vsel %vm52, %v1306, 0
    %1316 = vmatprep.subr.mxu0 0.0
    %1317 = vmatpush1.msra.mxu0 %v220
    %1318 = vmatprep.subr.mxu0 0.0
    %1319 = vmatpush1.msra.mxu0 %v221
    %1320 = vmatprep.subr.mxu0 0.0
    %1321 = vmatpush1.msra.mxu0 %v222
    %1322 = vmatprep.subr.mxu0 0.0
    %1323 = vmatpush1.msra.mxu0 %v223
    %1324 = vmatprep.subr.mxu0 0.0
    %1325 = vmatpush1.msra.mxu0 0.0
    %1326 = vmatprep.subr.mxu0 0.0
    %1327 = vmatpush1.msra.mxu0 0.0
    %1328 = vmatprep.subr.mxu0 0.0
    %1329 = vmatpush1.msra.mxu0 0.0
    %1330 = vmatprep.subr.mxu0 0.0
    %1331 = vmatpush1.msra.mxu0 0.0
    %1332 = vmatprep.subr.mxu0 0.0
    %1333 = vmatpush1.msra.mxu0 0.0
    %1334 = vmatprep.subr.mxu0 0.0
    %1335 = vmatpush1.msra.mxu0 0.0
    %1336 = vmatprep.subr.mxu0 0.0
    %1337 = vmatpush1.msra.mxu0 0.0
    %1338 = vmatprep.subr.mxu0 0.0
    %1339 = vmatpush1.msra.mxu0 0.0
    %1340 = vmatprep.subr.mxu0 0.0
    %1341 = vmatpush1.msra.mxu0 0.0
    %1342 = vmatprep.subr.mxu0 0.0
    %1343 = vmatpush1.msra.mxu0 0.0
    %1344 = vmatprep.subr.mxu0 0.0
    %1345 = vmatpush1.msra.mxu0 0.0
    %1346 = vmatprep.subr.mxu0 0.0
    %1347 = vmatpush1.msra.mxu0 0.0
    %1348 = vmatprep.subr.mxu0 0.0
    %1349 = vmatpush1.msra.mxu0 0.0
    %1350 = vmatprep.subr.mxu0 0.0
    %1351 = vmatpush1.msra.mxu0 0.0
    %1352 = vmatprep.subr.mxu0 0.0
    %1353 = vmatpush1.msra.mxu0 0.0
    %1354 = vmatprep.subr.mxu0 0.0
    %1355 = vmatpush1.msra.mxu0 0.0
    %1356 = vmatprep.subr.mxu0 0.0
    %1357 = vmatpush1.msra.mxu0 0.0
    %1358 = vmatprep.subr.mxu0 0.0
    %1359 = vmatpush1.msra.mxu0 0.0
    %1360 = vmatprep.subr.mxu0 0.0
    %1361 = vmatpush1.msra.mxu0 0.0
    %1362 = vmatprep.subr.mxu0 0.0
    %1363 = vmatpush1.msra.mxu0 0.0
    %1364 = vmatprep.subr.mxu0 0.0
    %1365 = vmatpush1.msra.mxu0 0.0
    %1366 = vmatprep.subr.mxu0 0.0
    %1367 = vmatpush1.msra.mxu0 0.0
    %1368 = vmatprep.subr.mxu0 0.0
    %1369 = vmatpush1.msra.mxu0 0.0
    %1370 = vmatprep.subr.mxu0 0.0
    %1371 = vmatpush1.msra.mxu0 0.0
    %1372 = vmatprep.subr.mxu0 0.0
    %1373 = vmatpush1.msra.mxu0 0.0
    %1374 = vmatprep.subr.mxu0 0.0
    %1375 = vmatpush1.msra.mxu0 0.0
    %1376 = vmatprep.subr.mxu0 0.0
    %1377 = vmatpush1.msra.mxu0 0.0
    %1378 = vmatprep.subr.mxu0 0.0
    %1379 = vmatpush1.msra.mxu0 0.0
    %1380 = vmatprep.mubr.f32.mxu0 0.0
    %1381 = vmatmul.mubr.f32.gmra.mrb[0].mxu0 %v1314
    %v1382 = vpop.f32.mrb[0].mxu0
    %v1383 = vadd.f32 0.0, %v1382
    %v1384 = vpop.f32.mrb[0].mxu0
    %1385 = vdwg.mxu0
    %v1387 = vrot.slane %v1383, 6
    %v1389 = vadd.f32 %v131, %v1387
    %v1390 = vrot.slane %v1303, 6
    %1391 = vrot.lane.b32.xlu0 %v1390, 64
    %v1392 = vpop.permute.xlu0 %1391
    %v1393 = vsel %vm52, %v1392, 0
    %1395 = vmatprep.subr.mxu0 0.0
    %1396 = vmatpush1.msra.mxu0 %v224
    %1397 = vmatprep.subr.mxu0 0.0
    %1398 = vmatpush1.msra.mxu0 %v225
    %1399 = vmatprep.subr.mxu0 0.0
    %1400 = vmatpush1.msra.mxu0 %v226
    %1401 = vmatprep.subr.mxu0 0.0
    %1402 = vmatpush1.msra.mxu0 %v227
    %1403 = vmatprep.subr.mxu0 0.0
    %1404 = vmatpush1.msra.mxu0 0.0
    %1405 = vmatprep.subr.mxu0 0.0
    %1406 = vmatpush1.msra.mxu0 0.0
    %1407 = vmatprep.subr.mxu0 0.0
    %1408 = vmatpush1.msra.mxu0 0.0
    %1409 = vmatprep.subr.mxu0 0.0
    %1410 = vmatpush1.msra.mxu0 0.0
    %1411 = vmatprep.subr.mxu0 0.0
    %1412 = vmatpush1.msra.mxu0 0.0
    %1413 = vmatprep.subr.mxu0 0.0
    %1414 = vmatpush1.msra.mxu0 0.0
    %1415 = vmatprep.subr.mxu0 0.0
    %1416 = vmatpush1.msra.mxu0 0.0
    %1417 = vmatprep.subr.mxu0 0.0
    %1418 = vmatpush1.msra.mxu0 0.0
    %1419 = vmatprep.subr.mxu0 0.0
    %1420 = vmatpush1.msra.mxu0 0.0
    %1421 = vmatprep.subr.mxu0 0.0
    %1422 = vmatpush1.msra.mxu0 0.0
    %1423 = vmatprep.subr.mxu0 0.0
    %1424 = vmatpush1.msra.mxu0 0.0
    %1425 = vmatprep.subr.mxu0 0.0
    %1426 = vmatpush1.msra.mxu0 0.0
    %1427 = vmatprep.subr.mxu0 0.0
    %1428 = vmatpush1.msra.mxu0 0.0
    %1429 = vmatprep.subr.mxu0 0.0
    %1430 = vmatpush1.msra.mxu0 0.0
    %1431 = vmatprep.subr.mxu0 0.0
    %1432 = vmatpush1.msra.mxu0 0.0
    %1433 = vmatprep.subr.mxu0 0.0
    %1434 = vmatpush1.msra.mxu0 0.0
    %1435 = vmatprep.subr.mxu0 0.0
    %1436 = vmatpush1.msra.mxu0 0.0
    %1437 = vmatprep.subr.mxu0 0.0
    %1438 = vmatpush1.msra.mxu0 0.0
    %1439 = vmatprep.subr.mxu0 0.0
    %1440 = vmatpush1.msra.mxu0 0.0
    %1441 = vmatprep.subr.mxu0 0.0
    %1442 = vmatpush1.msra.mxu0 0.0
    %1443 = vmatprep.subr.mxu0 0.0
    %1444 = vmatpush1.msra.mxu0 0.0
    %1445 = vmatprep.subr.mxu0 0.0
    %1446 = vmatpush1.msra.mxu0 0.0
    %1447 = vmatprep.subr.mxu0 0.0
    %1448 = vmatpush1.msra.mxu0 0.0
    %1449 = vmatprep.subr.mxu0 0.0
    %1450 = vmatpush1.msra.mxu0 0.0
    %1451 = vmatprep.subr.mxu0 0.0
    %1452 = vmatpush1.msra.mxu0 0.0
    %1453 = vmatprep.subr.mxu0 0.0
    %1454 = vmatpush1.msra.mxu0 0.0
    %1455 = vmatprep.subr.mxu0 0.0
    %1456 = vmatpush1.msra.mxu0 0.0
    %1457 = vmatprep.subr.mxu0 0.0
    %1458 = vmatpush1.msra.mxu0 0.0
    %1459 = vmatprep.mubr.f32.mxu0 0.0
    %1460 = vmatmul.mubr.f32.gmra.mrb[0].mxu0 %v1393
    %v1461 = vpop.f32.mrb[0].mxu0
    %v1462 = vadd.f32 0.0, %v1461
    %v1463 = vpop.f32.mrb[0].mxu0
    %1464 = vdwg.mxu0
    %v1466 = vrot.slane %v1462, 4
    %v1468 = vadd.f32 %v212, %v1466
    %v1469 = vxor.u32 %v1389, 2147483648
    %v1470 = vmul.f32 %v1469, 1.442695
    %v1471 = vpow.pop %v1470
    %v1472 = vadd.f32 %v1471, 1.0
    %v1473 = vrcp.pop %v1472
    %v1474 = vmul.f32 1.0, %v1473
    %v1475 = vtanh.pop %v1389
    %v1476 = vxor.u32 %v1468, 2147483648
    %v1477 = vmul.f32 %v1476, 1.442695
    %v1478 = vpow.pop %v1477
    %v1479 = vadd.f32 %v1478, 1.0
    %v1480 = vrcp.pop %v1479
    %v1481 = vmul.f32 1.0, %v1480
    %v1482 = vtanh.pop %v1468
    %v1484 = vrot.slane %v1277, 6
    %v1486 = vmul.f32 %v1474, %v1484
    %1488 = vrot.lane.b32.xlu0 %v1475, 32
    %v1489 = vpop.permute.xlu0 %1488
    %v1491 = vmul.f32 %v1474, %v1489
    %1493 = vrot.lane.b32.xlu0 %v1491, 32
    %v1494 = vpop.permute.xlu0 %1493
    %v1496 = vadd.f32 %v1486, %v1494
    %v1497 = vtanh.pop %v1496
    %1499 = vrot.lane.b32.xlu0 %v1497, 32
    %v1500 = vpop.permute.xlu0 %1499
    %v1502 = vmul.f32 %v1474, %v1500
    %v1504 = vrot.slane %v1297, 2
    %v1506 = vmul.f32 %v1481, %v1504
    %1508 = vrot.lane.b32.xlu0 %v1482, 32
    %v1509 = vpop.permute.xlu0 %1508
    %v1511 = vmul.f32 %v1481, %v1509
    %1513 = vrot.lane.b32.xlu0 %v1511, 32
    %v1514 = vpop.permute.xlu0 %1513
    %v1516 = vadd.f32 %v1506, %v1514
    %v1517 = vtanh.pop %v1516
    %1519 = vrot.lane.b32.xlu0 %v1517, 32
    %v1520 = vpop.permute.xlu0 %1519
    %v1522 = vmul.f32 %v1481, %v1520
    %1524 = vrot.lane.b32.xlu0 %v1502, 64
    %v1525 = vpop.permute.xlu0 %1524
    %1527 = vst.msk [vmem:[#allocation2 + $0x8] sm:$0xc] %vm649, %v1525
    %1529 = vrot.lane.b32.xlu0 %v1522, 64
    %v1530 = vpop.permute.xlu0 %1529
    %1532 = vst.msk [vmem:[#allocation3] sm:$0x30] %vm655, %v1530
    %v1533 = vrot.slane %v1502, 2
    %1534 = vrot.lane.b32.xlu0 %v1533, 64
    %v1535 = vpop.permute.xlu0 %1534
    %v1536 = vsel %vm52, %v1535, 0
    %1538 = vmatprep.subr.mxu0 0.0
    %1539 = vmatpush1.msra.mxu0 %v220
    %1540 = vmatprep.subr.mxu0 0.0
    %1541 = vmatpush1.msra.mxu0 %v221
    %1542 = vmatprep.subr.mxu0 0.0
    %1543 = vmatpush1.msra.mxu0 %v222
    %1544 = vmatprep.subr.mxu0 0.0
    %1545 = vmatpush1.msra.mxu0 %v223
    %1546 = vmatprep.subr.mxu0 0.0
    %1547 = vmatpush1.msra.mxu0 0.0
    %1548 = vmatprep.subr.mxu0 0.0
    %1549 = vmatpush1.msra.mxu0 0.0
    %1550 = vmatprep.subr.mxu0 0.0
    %1551 = vmatpush1.msra.mxu0 0.0
    %1552 = vmatprep.subr.mxu0 0.0
    %1553 = vmatpush1.msra.mxu0 0.0
    %1554 = vmatprep.subr.mxu0 0.0
    %1555 = vmatpush1.msra.mxu0 0.0
    %1556 = vmatprep.subr.mxu0 0.0
    %1557 = vmatpush1.msra.mxu0 0.0
    %1558 = vmatprep.subr.mxu0 0.0
    %1559 = vmatpush1.msra.mxu0 0.0
    %1560 = vmatprep.subr.mxu0 0.0
    %1561 = vmatpush1.msra.mxu0 0.0
    %1562 = vmatprep.subr.mxu0 0.0
    %1563 = vmatpush1.msra.mxu0 0.0
    %1564 = vmatprep.subr.mxu0 0.0
    %1565 = vmatpush1.msra.mxu0 0.0
    %1566 = vmatprep.subr.mxu0 0.0
    %1567 = vmatpush1.msra.mxu0 0.0
    %1568 = vmatprep.subr.mxu0 0.0
    %1569 = vmatpush1.msra.mxu0 0.0
    %1570 = vmatprep.subr.mxu0 0.0
    %1571 = vmatpush1.msra.mxu0 0.0
    %1572 = vmatprep.subr.mxu0 0.0
    %1573 = vmatpush1.msra.mxu0 0.0
    %1574 = vmatprep.subr.mxu0 0.0
    %1575 = vmatpush1.msra.mxu0 0.0
    %1576 = vmatprep.subr.mxu0 0.0
    %1577 = vmatpush1.msra.mxu0 0.0
    %1578 = vmatprep.subr.mxu0 0.0
    %1579 = vmatpush1.msra.mxu0 0.0
    %1580 = vmatprep.subr.mxu0 0.0
    %1581 = vmatpush1.msra.mxu0 0.0
    %1582 = vmatprep.subr.mxu0 0.0
    %1583 = vmatpush1.msra.mxu0 0.0
    %1584 = vmatprep.subr.mxu0 0.0
    %1585 = vmatpush1.msra.mxu0 0.0
    %1586 = vmatprep.subr.mxu0 0.0
    %1587 = vmatpush1.msra.mxu0 0.0
    %1588 = vmatprep.subr.mxu0 0.0
    %1589 = vmatpush1.msra.mxu0 0.0
    %1590 = vmatprep.subr.mxu0 0.0
    %1591 = vmatpush1.msra.mxu0 0.0
    %1592 = vmatprep.subr.mxu0 0.0
    %1593 = vmatpush1.msra.mxu0 0.0
    %1594 = vmatprep.subr.mxu0 0.0
    %1595 = vmatpush1.msra.mxu0 0.0
    %1596 = vmatprep.subr.mxu0 0.0
    %1597 = vmatpush1.msra.mxu0 0.0
    %1598 = vmatprep.subr.mxu0 0.0
    %1599 = vmatpush1.msra.mxu0 0.0
    %1600 = vmatprep.subr.mxu0 0.0
    %1601 = vmatpush1.msra.mxu0 0.0
    %1602 = vmatprep.mubr.f32.mxu0 0.0
    %1603 = vmatmul.mubr.f32.gmra.mrb[0].mxu0 %v1536
    %v1604 = vpop.f32.mrb[0].mxu0
    %v1605 = vadd.f32 0.0, %v1604
    %v1606 = vpop.f32.mrb[0].mxu0
    %1607 = vdwg.mxu0
    %v1609 = vrot.slane %v1605, 4
    %v1611 = vadd.f32 %v131, %v1609
    %v1612 = vrot.slane %v1522, 4
    %1613 = vrot.lane.b32.xlu0 %v1612, 64
    %v1614 = vpop.permute.xlu0 %1613
    %v1615 = vsel %vm52, %v1614, 0
    %1617 = vmatprep.subr.mxu0 0.0
    %1618 = vmatpush1.msra.mxu0 %v224
    %1619 = vmatprep.subr.mxu0 0.0
    %1620 = vmatpush1.msra.mxu0 %v225
    %1621 = vmatprep.subr.mxu0 0.0
    %1622 = vmatpush1.msra.mxu0 %v226
    %1623 = vmatprep.subr.mxu0 0.0
    %1624 = vmatpush1.msra.mxu0 %v227
    %1625 = vmatprep.subr.mxu0 0.0
    %1626 = vmatpush1.msra.mxu0 0.0
    %1627 = vmatprep.subr.mxu0 0.0
    %1628 = vmatpush1.msra.mxu0 0.0
    %1629 = vmatprep.subr.mxu0 0.0
    %1630 = vmatpush1.msra.mxu0 0.0
    %1631 = vmatprep.subr.mxu0 0.0
    %1632 = vmatpush1.msra.mxu0 0.0
    %1633 = vmatprep.subr.mxu0 0.0
    %1634 = vmatpush1.msra.mxu0 0.0
    %1635 = vmatprep.subr.mxu0 0.0
    %1636 = vmatpush1.msra.mxu0 0.0
    %1637 = vmatprep.subr.mxu0 0.0
    %1638 = vmatpush1.msra.mxu0 0.0
    %1639 = vmatprep.subr.mxu0 0.0
    %1640 = vmatpush1.msra.mxu0 0.0
    %1641 = vmatprep.subr.mxu0 0.0
    %1642 = vmatpush1.msra.mxu0 0.0
    %1643 = vmatprep.subr.mxu0 0.0
    %1644 = vmatpush1.msra.mxu0 0.0
    %1645 = vmatprep.subr.mxu0 0.0
    %1646 = vmatpush1.msra.mxu0 0.0
    %1647 = vmatprep.subr.mxu0 0.0
    %1648 = vmatpush1.msra.mxu0 0.0
    %1649 = vmatprep.subr.mxu0 0.0
    %1650 = vmatpush1.msra.mxu0 0.0
    %1651 = vmatprep.subr.mxu0 0.0
    %1652 = vmatpush1.msra.mxu0 0.0
    %1653 = vmatprep.subr.mxu0 0.0
    %1654 = vmatpush1.msra.mxu0 0.0
    %1655 = vmatprep.subr.mxu0 0.0
    %1656 = vmatpush1.msra.mxu0 0.0
    %1657 = vmatprep.subr.mxu0 0.0
    %1658 = vmatpush1.msra.mxu0 0.0
    %1659 = vmatprep.subr.mxu0 0.0
    %1660 = vmatpush1.msra.mxu0 0.0
    %1661 = vmatprep.subr.mxu0 0.0
    %1662 = vmatpush1.msra.mxu0 0.0
    %1663 = vmatprep.subr.mxu0 0.0
    %1664 = vmatpush1.msra.mxu0 0.0
    %1665 = vmatprep.subr.mxu0 0.0
    %1666 = vmatpush1.msra.mxu0 0.0
    %1667 = vmatprep.subr.mxu0 0.0
    %1668 = vmatpush1.msra.mxu0 0.0
    %1669 = vmatprep.subr.mxu0 0.0
    %1670 = vmatpush1.msra.mxu0 0.0
    %1671 = vmatprep.subr.mxu0 0.0
    %1672 = vmatpush1.msra.mxu0 0.0
    %1673 = vmatprep.subr.mxu0 0.0
    %1674 = vmatpush1.msra.mxu0 0.0
    %1675 = vmatprep.subr.mxu0 0.0
    %1676 = vmatpush1.msra.mxu0 0.0
    %1677 = vmatprep.subr.mxu0 0.0
    %1678 = vmatpush1.msra.mxu0 0.0
    %1679 = vmatprep.subr.mxu0 0.0
    %1680 = vmatpush1.msra.mxu0 0.0
    %1681 = vmatprep.mubr.f32.mxu0 0.0
    %1682 = vmatmul.mubr.f32.gmra.mrb[0].mxu0 %v1615
    %v1683 = vpop.f32.mrb[0].mxu0
    %v1684 = vadd.f32 0.0, %v1683
    %v1685 = vpop.f32.mrb[0].mxu0
    %1686 = vdwg.mxu0
    %v1688 = vrot.slane %v1684, 6
    %v1690 = vadd.f32 %v212, %v1688
    %v1691 = vxor.u32 %v1611, 2147483648
    %v1692 = vmul.f32 %v1691, 1.442695
    %v1693 = vpow.pop %v1692
    %v1694 = vadd.f32 %v1693, 1.0
    %v1695 = vrcp.pop %v1694
    %v1696 = vmul.f32 1.0, %v1695
    %v1697 = vtanh.pop %v1611
    %v1698 = vxor.u32 %v1690, 2147483648
    %v1699 = vmul.f32 %v1698, 1.442695
    %v1700 = vpow.pop %v1699
    %v1701 = vadd.f32 %v1700, 1.0
    %v1702 = vrcp.pop %v1701
    %v1703 = vmul.f32 1.0, %v1702
    %v1704 = vtanh.pop %v1690
    %v1706 = vrot.slane %v1496, 6
    %v1708 = vmul.f32 %v1696, %v1706
    %1710 = vrot.lane.b32.xlu0 %v1697, 32
    %v1711 = vpop.permute.xlu0 %1710
    %v1713 = vmul.f32 %v1696, %v1711
    %1715 = vrot.lane.b32.xlu0 %v1713, 32
    %v1716 = vpop.permute.xlu0 %1715
    %v1718 = vadd.f32 %v1708, %v1716
    %v1719 = vtanh.pop %v1718
    %1721 = vrot.lane.b32.xlu0 %v1719, 32
    %v1722 = vpop.permute.xlu0 %1721
    %v1724 = vmul.f32 %v1696, %v1722
    %v1726 = vrot.slane %v1516, 2
    %v1728 = vmul.f32 %v1703, %v1726
    %1730 = vrot.lane.b32.xlu0 %v1704, 32
    %v1731 = vpop.permute.xlu0 %1730
    %v1733 = vmul.f32 %v1703, %v1731
    %1735 = vrot.lane.b32.xlu0 %v1733, 32
    %v1736 = vpop.permute.xlu0 %1735
    %v1738 = vadd.f32 %v1728, %v1736
    %v1739 = vtanh.pop %v1738
    %1741 = vrot.lane.b32.xlu0 %v1739, 32
    %v1742 = vpop.permute.xlu0 %1741
    %v1744 = vmul.f32 %v1703, %v1742
    %1746 = vrot.lane.b32.xlu0 %v1724, 64
    %v1747 = vpop.permute.xlu0 %1746
    %1749 = vst.msk [vmem:[#allocation2 + $0x8] sm:$0x30] %vm655, %v1747
    %1751 = vrot.lane.b32.xlu0 %v1744, 64
    %v1752 = vpop.permute.xlu0 %1751
    %1754 = vst.msk [vmem:[#allocation3] sm:$0xc] %vm649, %v1752
    %v1755 = vrot.slane %v1724, 4
    %1756 = vrot.lane.b32.xlu0 %v1755, 64
    %v1757 = vpop.permute.xlu0 %1756
    %v1758 = vsel %vm52, %v1757, 0
    %1760 = vmatprep.subr.mxu0 0.0
    %1761 = vmatpush1.msra.mxu0 %v220
    %1762 = vmatprep.subr.mxu0 0.0
    %1763 = vmatpush1.msra.mxu0 %v221
    %1764 = vmatprep.subr.mxu0 0.0
    %1765 = vmatpush1.msra.mxu0 %v222
    %1766 = vmatprep.subr.mxu0 0.0
    %1767 = vmatpush1.msra.mxu0 %v223
    %1768 = vmatprep.subr.mxu0 0.0
    %1769 = vmatpush1.msra.mxu0 0.0
    %1770 = vmatprep.subr.mxu0 0.0
    %1771 = vmatpush1.msra.mxu0 0.0
    %1772 = vmatprep.subr.mxu0 0.0
    %1773 = vmatpush1.msra.mxu0 0.0
    %1774 = vmatprep.subr.mxu0 0.0
    %1775 = vmatpush1.msra.mxu0 0.0
    %1776 = vmatprep.subr.mxu0 0.0
    %1777 = vmatpush1.msra.mxu0 0.0
    %1778 = vmatprep.subr.mxu0 0.0
    %1779 = vmatpush1.msra.mxu0 0.0
    %1780 = vmatprep.subr.mxu0 0.0
    %1781 = vmatpush1.msra.mxu0 0.0
    %1782 = vmatprep.subr.mxu0 0.0
    %1783 = vmatpush1.msra.mxu0 0.0
    %1784 = vmatprep.subr.mxu0 0.0
    %1785 = vmatpush1.msra.mxu0 0.0
    %1786 = vmatprep.subr.mxu0 0.0
    %1787 = vmatpush1.msra.mxu0 0.0
    %1788 = vmatprep.subr.mxu0 0.0
    %1789 = vmatpush1.msra.mxu0 0.0
    %1790 = vmatprep.subr.mxu0 0.0
    %1791 = vmatpush1.msra.mxu0 0.0
    %1792 = vmatprep.subr.mxu0 0.0
    %1793 = vmatpush1.msra.mxu0 0.0
    %1794 = vmatprep.subr.mxu0 0.0
    %1795 = vmatpush1.msra.mxu0 0.0
    %1796 = vmatprep.subr.mxu0 0.0
    %1797 = vmatpush1.msra.mxu0 0.0
    %1798 = vmatprep.subr.mxu0 0.0
    %1799 = vmatpush1.msra.mxu0 0.0
    %1800 = vmatprep.subr.mxu0 0.0
    %1801 = vmatpush1.msra.mxu0 0.0
    %1802 = vmatprep.subr.mxu0 0.0
    %1803 = vmatpush1.msra.mxu0 0.0
    %1804 = vmatprep.subr.mxu0 0.0
    %1805 = vmatpush1.msra.mxu0 0.0
    %1806 = vmatprep.subr.mxu0 0.0
    %1807 = vmatpush1.msra.mxu0 0.0
    %1808 = vmatprep.subr.mxu0 0.0
    %1809 = vmatpush1.msra.mxu0 0.0
    %1810 = vmatprep.subr.mxu0 0.0
    %1811 = vmatpush1.msra.mxu0 0.0
    %1812 = vmatprep.subr.mxu0 0.0
    %1813 = vmatpush1.msra.mxu0 0.0
    %1814 = vmatprep.subr.mxu0 0.0
    %1815 = vmatpush1.msra.mxu0 0.0
    %1816 = vmatprep.subr.mxu0 0.0
    %1817 = vmatpush1.msra.mxu0 0.0
    %1818 = vmatprep.subr.mxu0 0.0
    %1819 = vmatpush1.msra.mxu0 0.0
    %1820 = vmatprep.subr.mxu0 0.0
    %1821 = vmatpush1.msra.mxu0 0.0
    %1822 = vmatprep.subr.mxu0 0.0
    %1823 = vmatpush1.msra.mxu0 0.0
    %1824 = vmatprep.mubr.f32.mxu0 0.0
    %1825 = vmatmul.mubr.f32.gmra.mrb[0].mxu0 %v1758
    %v1826 = vpop.f32.mrb[0].mxu0
    %v1827 = vadd.f32 0.0, %v1826
    %v1828 = vpop.f32.mrb[0].mxu0
    %1829 = vdwg.mxu0
    %v1831 = vrot.slane %v1827, 2
    %v1833 = vadd.f32 %v131, %v1831
    %v1834 = vrot.slane %v1744, 2
    %1835 = vrot.lane.b32.xlu0 %v1834, 64
    %v1836 = vpop.permute.xlu0 %1835
    %v1837 = vsel %vm52, %v1836, 0
    %1839 = vmatprep.subr.mxu0 0.0
    %1840 = vmatpush1.msra.mxu0 %v224
    %1841 = vmatprep.subr.mxu0 0.0
    %1842 = vmatpush1.msra.mxu0 %v225
    %1843 = vmatprep.subr.mxu0 0.0
    %1844 = vmatpush1.msra.mxu0 %v226
    %1845 = vmatprep.subr.mxu0 0.0
    %1846 = vmatpush1.msra.mxu0 %v227
    %1847 = vmatprep.subr.mxu0 0.0
    %1848 = vmatpush1.msra.mxu0 0.0
    %1849 = vmatprep.subr.mxu0 0.0
    %1850 = vmatpush1.msra.mxu0 0.0
    %1851 = vmatprep.subr.mxu0 0.0
    %1852 = vmatpush1.msra.mxu0 0.0
    %1853 = vmatprep.subr.mxu0 0.0
    %1854 = vmatpush1.msra.mxu0 0.0
    %1855 = vmatprep.subr.mxu0 0.0
    %1856 = vmatpush1.msra.mxu0 0.0
    %1857 = vmatprep.subr.mxu0 0.0
    %1858 = vmatpush1.msra.mxu0 0.0
    %1859 = vmatprep.subr.mxu0 0.0
    %1860 = vmatpush1.msra.mxu0 0.0
    %1861 = vmatprep.subr.mxu0 0.0
    %1862 = vmatpush1.msra.mxu0 0.0
    %1863 = vmatprep.subr.mxu0 0.0
    %1864 = vmatpush1.msra.mxu0 0.0
    %1865 = vmatprep.subr.mxu0 0.0
    %1866 = vmatpush1.msra.mxu0 0.0
    %1867 = vmatprep.subr.mxu0 0.0
    %1868 = vmatpush1.msra.mxu0 0.0
    %1869 = vmatprep.subr.mxu0 0.0
    %1870 = vmatpush1.msra.mxu0 0.0
    %1871 = vmatprep.subr.mxu0 0.0
    %1872 = vmatpush1.msra.mxu0 0.0
    %1873 = vmatprep.subr.mxu0 0.0
    %1874 = vmatpush1.msra.mxu0 0.0
    %1875 = vmatprep.subr.mxu0 0.0
    %1876 = vmatpush1.msra.mxu0 0.0
    %1877 = vmatprep.subr.mxu0 0.0
    %1878 = vmatpush1.msra.mxu0 0.0
    %1879 = vmatprep.subr.mxu0 0.0
    %1880 = vmatpush1.msra.mxu0 0.0
    %1881 = vmatprep.subr.mxu0 0.0
    %1882 = vmatpush1.msra.mxu0 0.0
    %1883 = vmatprep.subr.mxu0 0.0
    %1884 = vmatpush1.msra.mxu0 0.0
    %1885 = vmatprep.subr.mxu0 0.0
    %1886 = vmatpush1.msra.mxu0 0.0
    %1887 = vmatprep.subr.mxu0 0.0
    %1888 = vmatpush1.msra.mxu0 0.0
    %1889 = vmatprep.subr.mxu0 0.0
    %1890 = vmatpush1.msra.mxu0 0.0
    %1891 = vmatprep.subr.mxu0 0.0
    %1892 = vmatpush1.msra.mxu0 0.0
    %1893 = vmatprep.subr.mxu0 0.0
    %1894 = vmatpush1.msra.mxu0 0.0
    %1895 = vmatprep.subr.mxu0 0.0
    %1896 = vmatpush1.msra.mxu0 0.0
    %1897 = vmatprep.subr.mxu0 0.0
    %1898 = vmatpush1.msra.mxu0 0.0
    %1899 = vmatprep.subr.mxu0 0.0
    %1900 = vmatpush1.msra.mxu0 0.0
    %1901 = vmatprep.subr.mxu0 0.0
    %1902 = vmatpush1.msra.mxu0 0.0
    %1903 = vmatprep.mubr.f32.mxu0 0.0
    %1904 = vmatmul.mubr.f32.gmra.mrb[0].mxu0 %v1837
    %v1905 = vpop.f32.mrb[0].mxu0
    %v1906 = vadd.f32 0.0, %v1905
    %v1907 = vpop.f32.mrb[0].mxu0
    %1908 = vdwg.mxu0
    %v1909 = vadd.f32 %v212, %v1906
    %v1910 = vxor.u32 %v1833, 2147483648
    %v1911 = vmul.f32 %v1910, 1.442695
    %v1912 = vpow.pop %v1911
    %v1913 = vadd.f32 %v1912, 1.0
    %v1914 = vrcp.pop %v1913
    %v1915 = vmul.f32 1.0, %v1914
    %v1916 = vtanh.pop %v1833
    %v1917 = vxor.u32 %v1909, 2147483648
    %v1918 = vmul.f32 %v1917, 1.442695
    %v1919 = vpow.pop %v1918
    %v1920 = vadd.f32 %v1919, 1.0
    %v1921 = vrcp.pop %v1920
    %v1922 = vmul.f32 1.0, %v1921
    %v1923 = vtanh.pop %v1909
    %v1925 = vrot.slane %v1718, 6
    %v1927 = vmul.f32 %v1915, %v1925
    %1929 = vrot.lane.b32.xlu0 %v1916, 32
    %v1930 = vpop.permute.xlu0 %1929
    %v1932 = vmul.f32 %v1915, %v1930
    %1934 = vrot.lane.b32.xlu0 %v1932, 32
    %v1935 = vpop.permute.xlu0 %1934
    %v1937 = vadd.f32 %v1927, %v1935
    %v1938 = vtanh.pop %v1937
    %1940 = vrot.lane.b32.xlu0 %v1938, 32
    %v1941 = vpop.permute.xlu0 %1940
    %v1943 = vmul.f32 %v1915, %v1941
    %v1945 = vrot.slane %v1738, 2
    %v1947 = vmul.f32 %v1922, %v1945
    %1949 = vrot.lane.b32.xlu0 %v1923, 32
    %v1950 = vpop.permute.xlu0 %1949
    %v1952 = vmul.f32 %v1922, %v1950
    %1954 = vrot.lane.b32.xlu0 %v1952, 32
    %v1955 = vpop.permute.xlu0 %1954
    %v1957 = vadd.f32 %v1947, %v1955
    %v1958 = vtanh.pop %v1957
    %1960 = vrot.lane.b32.xlu0 %v1958, 32
    %v1961 = vpop.permute.xlu0 %1960
    %v1963 = vmul.f32 %v1922, %v1961
    %1965 = vrot.lane.b32.xlu0 %v1943, 64
    %v1966 = vpop.permute.xlu0 %1965
    %1968 = vst.msk [vmem:[#allocation2 + $0x8] sm:$0xc0] %vm434, %v1966
    %1970 = vrot.lane.b32.xlu0 %v1963, 64
    %v1971 = vpop.permute.xlu0 %1970
    %1973 = vst.msk [vmem:[#allocation3] sm:$0x3] %vm428, %v1971
    %v1974 = vld [vmem:[#allocation2] sm:$0xff]
    %v1975 = vld [vmem:[#allocation2 + $0x8] sm:$0xff]
    %v1976 = vld [vmem:[#allocation3] sm:$0xff]
    %v1977 = vld [vmem:[#allocation3 + $0x8] sm:$0xff]
    %v1978 = vadd.f32 %v1974, %v1976
    %v1979 = vadd.f32 %v1975, %v1977
    %1980 = vst.msk [vmem:[#allocation4] sm:$0xff] %vm52, %v1978
    %1981 = vst.msk [vmem:[#allocation4 + $0x8] sm:$0xff] %vm52, %v1979
    %v1982 = vld [vmem:[%s7] sm:$0xff]
    %v1983 = vld [vmem:[%s7 + $0x8] sm:$0xff]
    %v1984 = vld [vmem:[%s7 + $0x10] sm:$0xff]
    %v1985 = vld [vmem:[%s7 + $0x18] sm:$0xff]
    %v1986 = vld [vmem:[%s8] sm:$0x1]
    %v1988 = vlaneseq
    %v1989 = vshrl.u32 %v1988, 7
    %v1990 = vsub.s32 0, %v1989
    %v1991 = vrot.slane %v1986, %v1990
    %v1994 = vsel %vm52, %v1978, 0
    %v1997 = vsel %vm52, %v1979, 0
    %1999 = vmatprep.subr.mxu0 0.0
    %2000 = vmatpush1.msra.mxu0 %v1982
    %2001 = vmatprep.subr.mxu0 0.0
    %2002 = vmatpush1.msra.mxu0 %v1983
    %2003 = vmatprep.subr.mxu0 0.0
    %2004 = vmatpush1.msra.mxu0 %v1984
    %2005 = vmatprep.subr.mxu0 0.0
    %2006 = vmatpush1.msra.mxu0 %v1985
    %2007 = vmatprep.subr.mxu0 0.0
    %2008 = vmatpush1.msra.mxu0 0.0
    %2009 = vmatprep.subr.mxu0 0.0
    %2010 = vmatpush1.msra.mxu0 0.0
    %2011 = vmatprep.subr.mxu0 0.0
    %2012 = vmatpush1.msra.mxu0 0.0
    %2013 = vmatprep.subr.mxu0 0.0
    %2014 = vmatpush1.msra.mxu0 0.0
    %2015 = vmatprep.subr.mxu0 0.0
    %2016 = vmatpush1.msra.mxu0 0.0
    %2017 = vmatprep.subr.mxu0 0.0
    %2018 = vmatpush1.msra.mxu0 0.0
    %2019 = vmatprep.subr.mxu0 0.0
    %2020 = vmatpush1.msra.mxu0 0.0
    %2021 = vmatprep.subr.mxu0 0.0
    %2022 = vmatpush1.msra.mxu0 0.0
    %2023 = vmatprep.subr.mxu0 0.0
    %2024 = vmatpush1.msra.mxu0 0.0
    %2025 = vmatprep.subr.mxu0 0.0
    %2026 = vmatpush1.msra.mxu0 0.0
    %2027 = vmatprep.subr.mxu0 0.0
    %2028 = vmatpush1.msra.mxu0 0.0
    %2029 = vmatprep.subr.mxu0 0.0
    %2030 = vmatpush1.msra.mxu0 0.0
    %2031 = vmatprep.subr.mxu0 0.0
    %2032 = vmatpush1.msra.mxu0 0.0
    %2033 = vmatprep.subr.mxu0 0.0
    %2034 = vmatpush1.msra.mxu0 0.0
    %2035 = vmatprep.subr.mxu0 0.0
    %2036 = vmatpush1.msra.mxu0 0.0
    %2037 = vmatprep.subr.mxu0 0.0
    %2038 = vmatpush1.msra.mxu0 0.0
    %2039 = vmatprep.subr.mxu0 0.0
    %2040 = vmatpush1.msra.mxu0 0.0
    %2041 = vmatprep.subr.mxu0 0.0
    %2042 = vmatpush1.msra.mxu0 0.0
    %2043 = vmatprep.subr.mxu0 0.0
    %2044 = vmatpush1.msra.mxu0 0.0
    %2045 = vmatprep.subr.mxu0 0.0
    %2046 = vmatpush1.msra.mxu0 0.0
    %2047 = vmatprep.subr.mxu0 0.0
    %2048 = vmatpush1.msra.mxu0 0.0
    %2049 = vmatprep.subr.mxu0 0.0
    %2050 = vmatpush1.msra.mxu0 0.0
    %2051 = vmatprep.subr.mxu0 0.0
    %2052 = vmatpush1.msra.mxu0 0.0
    %2053 = vmatprep.subr.mxu0 0.0
    %2054 = vmatpush1.msra.mxu0 0.0
    %2055 = vmatprep.subr.mxu0 0.0
    %2056 = vmatpush1.msra.mxu0 0.0
    %2057 = vmatprep.subr.mxu0 0.0
    %2058 = vmatpush1.msra.mxu0 0.0
    %2059 = vmatprep.subr.mxu0 0.0
    %2060 = vmatpush1.msra.mxu0 0.0
    %2061 = vmatprep.subr.mxu0 0.0
    %2062 = vmatpush1.msra.mxu0 0.0
    %2063 = vmatprep.mubr.f32.mxu0 0.0
    %2064 = vmatmul.mubr.f32.gmra.mrb[0].mxu0 %v1994
    %v2065 = vpop.f32.mrb[0].mxu0
    %v2066 = vadd.f32 %v1991, %v2065
    %v2067 = vpop.f32.mrb[0].mxu0
    %2068 = vmatprep.mubr.f32.mxu0 0.0
    %2069 = vmatmul.mubr.f32.gmra.mrb[0].mxu0 %v1997
    %v2070 = vpop.f32.mrb[0].mxu0
    %v2071 = vadd.f32 %v1991, %v2070
    %v2072 = vpop.f32.mrb[0].mxu0
    %2073 = vdwg.mxu0
    %2074 = vst.msk [vmem:[#allocation6] sm:$0xff] %vm52, %v2066
    %2075 = vst.msk [vmem:[#allocation6 + $0x8] sm:$0xff] %vm52, %v2071
    %v2076 = vrot.slane %v1963, 2
    %v2078 = vadd.f32 %v1943, %v2076
    %2080 = vrot.lane.b32.xlu0 %v2078, 64
    %v2081 = vpop.permute.xlu0 %2080
    %2083 = vst.msk [vmem:[#allocation8 - $0x6] sm:$0xc0] %vm434, %v2081
    %v2085 = vrot.slane %v1957, 2
    %v2087 = vadd.f32 %v1937, %v2085
    %2089 = vrot.lane.b32.xlu0 %v2087, 96
    %v2090 = vpop.permute.xlu0 %2089
    %2092 = vst.msk [vmem:[#allocation9 - $0x6] sm:$0xc0] %vm434, %v2090
    // Predicated region
    $region38: #{encoder_forward.1} parent=1 // pred_check
      _
    $region39: #{encoder_forward.1} parent=1 // pred_check_branch
      %2094 = sbr.rel (0) target = $region41
    $region40: #{encoder_forward.1} parent=1 // pred_region
      %s2096 = ssub.s32 256, 256
      %2097 = vsyncadd [#allocation5], %s2096
      %s2098 = sshll.u32 [#allocation4], 4
      %s2099 = int_to_ptr.vmem [resolvable:$true] %s2098
      %2104 = dma.vmem_to_hbm [thread:$0]  %s2099, 256, %s9, [#allocation5], 128, 128, 8
    $region41: #{encoder_forward.1} parent=1 // pred_fallthru
      _
    // Predicated region
    $region42: #{encoder_forward.1} parent=1 // pred_check
      _
    $region43: #{encoder_forward.1} parent=1 // pred_check_branch
      %2106 = sbr.rel (0) target = $region45
    $region44: #{encoder_forward.1} parent=1 // pred_region
      %s2108 = ssub.s32 256, 256
      %2109 = vsyncadd [#allocation7], %s2108
      %s2110 = sshll.u32 [#allocation6], 4
      %s2111 = int_to_ptr.vmem [resolvable:$true] %s2110
      %2116 = dma.vmem_to_hbm [thread:$0]  %s2111, 256, %s10, [#allocation7], 128, 128, 8
    $region45: #{encoder_forward.1} parent=1 // pred_fallthru
      _
    // Predicated region
    $region46: #{encoder_forward.1} parent=1 // pred_check
      _
    $region47: #{encoder_forward.1} parent=1 // pred_check_branch
      %2118 = sbr.rel (0) target = $region49
    $region48: #{encoder_forward.1} parent=1 // pred_region
      %s2120 = ssub.s32 32, 32
      %2121 = vsyncadd [#allocation7], %s2120
      %s2123 = sshll.u32 [#allocation8], 4
      %s2124 = int_to_ptr.vmem [resolvable:$true] %s2123
      %2126 = dma.vmem_to_hbm [thread:$0]  %s2124, 32, %s11, [#allocation7]
    $region49: #{encoder_forward.1} parent=1 // pred_fallthru
      _
    // Predicated region
    $region50: #{encoder_forward.1} parent=1 // pred_check
      _
    $region51: #{encoder_forward.1} parent=1 // pred_check_branch
      %2128 = sbr.rel (0) target = $region53
    $region52: #{encoder_forward.1} parent=1 // pred_region
      %s2130 = ssub.s32 32, 32
      %2131 = vsyncadd [#allocation10], %s2130
      %s2133 = sshll.u32 [#allocation9], 4
      %s2134 = int_to_ptr.vmem [resolvable:$true] %s2133
      %2136 = dma.vmem_to_hbm [thread:$0]  %s2134, 32, %s12, [#allocation10]
    $region53: #{encoder_forward.1} parent=1 // pred_fallthru
      _
    // Predicated region
    $region54: #{encoder_forward.1} parent=1 // pred_check
      _
    $region55: #{encoder_forward.1} parent=1 // pred_check_branch
      %2138 = sbr.rel (0) target = $region57
    $region56: #{encoder_forward.1} parent=1 // pred_region
      %2139 = dma.done [#allocation5], 256
    $region57: #{encoder_forward.1} parent=1 // pred_fallthru
      _
    // Predicated region
    $region58: #{encoder_forward.1} parent=1 // pred_check
      _
    $region59: #{encoder_forward.1} parent=1 // pred_check_branch
      %2141 = sbr.rel (0) target = $region61
    $region60: #{encoder_forward.1} parent=1 // pred_region
      %2142 = dma.done [#allocation7], 256
    $region61: #{encoder_forward.1} parent=1 // pred_fallthru
      _
    // Predicated region
    $region62: #{encoder_forward.1} parent=1 // pred_check
      _
    $region63: #{encoder_forward.1} parent=1 // pred_check_branch
      %2144 = sbr.rel (0) target = $region65
    $region64: #{encoder_forward.1} parent=1 // pred_region
      %2145 = dma.done [#allocation7], 32
    $region65: #{encoder_forward.1} parent=1 // pred_fallthru
      _
    // Predicated region
    $region66: #{encoder_forward.1} parent=1 // pred_check
      _
    $region67: #{encoder_forward.1} parent=1 // pred_check_branch
      %2147 = sbr.rel (0) target = $region69
    $region68: #{encoder_forward.1} parent=1 // pred_region
      %2148 = dma.done [#allocation10], 32
    $region69: #{encoder_forward.1} parent=1 // pred_fallthru
      _
    %2149 = vsyncpa [#allocation5], 1
    %2150 = vsyncpa [#allocation7], 1
    %2151 = vsyncpa [#allocation10], 1

</llo_original>
